<compile_context>
chip_gen: v7x
topology: tpu7x:2x2x1
jax: 0.10.0
libtpu: 0.0.40
codegen_flags: <defaults>
</compile_context>

<pallas_src>
import jax
import jax.numpy as jnp
from jax.experimental import pallas as pl
from jax.experimental.pallas import tpu as pltpu


def _round_up(n, m):
    return ((n + m - 1) // m) * m


def _pad2(a, rows, cols):
    r, c = a.shape
    return jnp.pad(a, ((0, rows - r), (0, cols - c)))


def _splinenet_kernel(x_ref,
                      w0_ref, b0_ref,
                      w1_ref, b1_ref,
                      w2_ref, b2_ref,
                      w3_ref, b3_ref,
                      o_ref):
    """Fused 4-layer MLP (relu, relu, relu, identity) on one batch tile.

    Matmuls run in the input compute dtype (bf16 by default) with f32
    accumulation; bias add and relu happen on the f32 accumulator.
    """
    cdtype = x_ref.dtype
    h = x_ref[...]
    # hidden layer 0
    h = jnp.dot(h, w0_ref[...], preferred_element_type=jnp.float32) + b0_ref[...]
    h = jnp.maximum(h, 0.0).astype(cdtype)
    # hidden layer 1
    h = jnp.dot(h, w1_ref[...], preferred_element_type=jnp.float32) + b1_ref[...]
    h = jnp.maximum(h, 0.0).astype(cdtype)
    # hidden layer 2
    h = jnp.dot(h, w2_ref[...], preferred_element_type=jnp.float32) + b2_ref[...]
    h = jnp.maximum(h, 0.0).astype(cdtype)
    # output layer (Identity output activation)
    y = jnp.dot(h, w3_ref[...], preferred_element_type=jnp.float32) + b3_ref[...]
    o_ref[...] = y.astype(o_ref.dtype)


def splinenet_forward(x, params, *, tile_b=256, compute_dtype=jnp.bfloat16):
    """x: (B, input_dim) f32; params: list of (W (in,out) f32, b (1,out) f32)."""
    assert tile_b % 8 == 0, "tile_b must be a multiple of 8 (sublane)"
    B, d_in = x.shape
    d_out = params[-1][0].shape[1]
    out_dtype = x.dtype

    # --- wrapper-side padding (numerically exact: padded channels are zero,
    # relu(0)=0, and the padded rows of the next weight are zero) ------------
    dims = [d_in] + [w.shape[1] for (w, _) in params]
    pdims = [_round_up(d, 128) for d in dims]

    padded = []
    for li, (w, b) in enumerate(params):
        wp = _pad2(w, pdims[li], pdims[li + 1]).astype(compute_dtype)
        bp = _pad2(b.reshape(1, -1), 1, pdims[li + 1]).astype(jnp.float32)
        padded.append((wp, bp))
    (w0, b0), (w1, b1), (w2, b2), (w3, b3) = padded

    # pad batch to a multiple of the tile and the input features to pdims[0]
    B_pad = _round_up(B, tile_b)
    xp = jnp.pad(x, ((0, B_pad - B), (0, pdims[0] - d_in))).astype(compute_dtype)

    def full_spec(arr):
        # Whole parameter resident in VMEM; same block for every grid step.
        return pl.BlockSpec(arr.shape, lambda i: (0,) * arr.ndim)

    itemsize = lambda a: a.size * a.dtype.itemsize
    flops = 2 * B_pad * sum(pdims[i] * pdims[i + 1] for i in range(len(pdims) - 1))
    bytes_accessed = (itemsize(xp)
                      + sum(itemsize(w) + itemsize(b) for (w, b) in padded)
                      + B_pad * pdims[-1] * jnp.dtype(out_dtype).itemsize)

    grid = (B_pad // tile_b,)
    out_padded = pl.pallas_call(
        _splinenet_kernel,
        out_shape=jax.ShapeDtypeStruct((B_pad, pdims[-1]), out_dtype),
        grid_spec=pltpu.PrefetchScalarGridSpec(
            num_scalar_prefetch=0,
            grid=grid,
            in_specs=[
                pl.BlockSpec((tile_b, pdims[0]), lambda i: (i, 0)),
                full_spec(w0), full_spec(b0),
                full_spec(w1), full_spec(b1),
                full_spec(w2), full_spec(b2),
                full_spec(w3), full_spec(b3),
            ],
            out_specs=pl.BlockSpec((tile_b, pdims[-1]), lambda i: (i, 0)),
        ),
        compiler_params=pltpu.CompilerParams(
            dimension_semantics=("parallel",)),
        cost_estimate=pl.CostEstimate(
            flops=flops, transcendentals=0, bytes_accessed=bytes_accessed),
    )(xp, w0, b0, w1, b1, w2, b2, w3, b3)

    # slice back to the unpadded batch / output width
    return out_padded[:B, :d_out]


def init_params(key, input_dim, latent_dim, layers):
    """Xavier-uniform weights (matching torch.nn.init.xavier_uniform_), zero bias."""
    dims = [input_dim] + list(layers) + [latent_dim]
    params = []
    for i in range(len(dims) - 1):
        fan_in, fan_out = dims[i], dims[i + 1]
        key, sub = jax.random.split(key)
        bound = (6.0 / (fan_in + fan_out)) ** 0.5
        w = jax.random.uniform(sub, (fan_in, fan_out), jnp.float32,
                               minval=-bound, maxval=bound)
        b = jnp.zeros((1, fan_out), jnp.float32)
        params.append((w, b))
    return params


def reference_forward(x, params):
    hp = jax.lax.Precision.HIGHEST
    (w0, b0), (w1, b1), (w2, b2), (w3, b3) = params
    h = jnp.maximum(jnp.dot(x, w0, precision=hp) + b0, 0.0)
    h = jnp.maximum(jnp.dot(h, w1, precision=hp) + b1, 0.0)
    h = jnp.maximum(jnp.dot(h, w2, precision=hp) + b2, 0.0)
    return jnp.dot(h, w3, precision=hp) + b3


if __name__ == "__main__":
    # Small shapes consistent with the module (MLP over feature vectors).
    # Non-multiple-of-128 hidden dims and a non-multiple-of-tile batch
    # exercise the wrapper-side zero-padding path.
    batch = 500
    input_dim = 16
    hidden_layers = [120, 200, 96]   # small stand-in for the default [300, 300, 300]
    latent_dim = 8

    key = jax.random.PRNGKey(0)
    key, xkey = jax.random.split(key)
    x = jax.random.normal(xkey, (batch, input_dim), jnp.float32)
    params = init_params(key, input_dim, latent_dim, hidden_layers)

    ref = reference_forward(x, params)

    # f32 MXU path: padding is exact, so this must match the f32 reference closely.
    out_f32 = jax.block_until_ready(
        splinenet_forward(x, params, tile_b=256, compute_dtype=jnp.float32))
    assert out_f32.shape == (batch, latent_dim)
    assert jnp.allclose(out_f32, ref, atol=1e-3, rtol=1e-3), "f32 path mismatch"

    # bf16 MXU path (default, fast): loose tolerance vs the f32 reference.
    out_bf16 = jax.block_until_ready(splinenet_forward(x, params, tile_b=256))
    assert out_bf16.shape == (batch, latent_dim)
    rel_err = jnp.max(jnp.abs(out_bf16 - ref)) / (jnp.max(jnp.abs(ref)) + 1e-6)
    assert rel_err < 2e-2, f"bf16 path mismatch (rel_err={rel_err})"

    print("KERNEL_OK")
</pallas_src>

<mosaic_0001>
module attributes {stable_mosaic.version = 11 : i64} {
  func.func @_splinenet_kernel(%arg0: i32, %arg1: memref<256x128xf32, #tpu.memory_space<vmem>>, %arg2: memref<128x128xf32, #tpu.memory_space<vmem>>, %arg3: memref<1x128xf32, #tpu.memory_space<vmem>>, %arg4: memref<128x256xf32, #tpu.memory_space<vmem>>, %arg5: memref<1x256xf32, #tpu.memory_space<vmem>>, %arg6: memref<256x128xf32, #tpu.memory_space<vmem>>, %arg7: memref<1x128xf32, #tpu.memory_space<vmem>>, %arg8: memref<128x128xf32, #tpu.memory_space<vmem>>, %arg9: memref<1x128xf32, #tpu.memory_space<vmem>>, %arg10: memref<256x128xf32, #tpu.memory_space<vmem>>) attributes {dimension_semantics = [#tpu.dimension_semantics<parallel>], iteration_bounds = array<i64: 2>, scalar_prefetch = 0 : i64, scratch_operands = 0 : i64, tpu.core_type = #tpu.core_type<tc>, window_params = [{transform_indices = @transform_0, window_bounds = array<i64: 256, 128>}, {pipeline_mode = #tpu.pipeline_mode<synchronous>, transform_indices = @transform_1, window_bounds = array<i64: 128, 128>}, {pipeline_mode = #tpu.pipeline_mode<synchronous>, transform_indices = @transform_2, window_bounds = array<i64: 1, 128>}, {pipeline_mode = #tpu.pipeline_mode<synchronous>, transform_indices = @transform_3, window_bounds = array<i64: 128, 256>}, {pipeline_mode = #tpu.pipeline_mode<synchronous>, transform_indices = @transform_4, window_bounds = array<i64: 1, 256>}, {pipeline_mode = #tpu.pipeline_mode<synchronous>, transform_indices = @transform_5, window_bounds = array<i64: 256, 128>}, {pipeline_mode = #tpu.pipeline_mode<synchronous>, transform_indices = @transform_6, window_bounds = array<i64: 1, 128>}, {pipeline_mode = #tpu.pipeline_mode<synchronous>, transform_indices = @transform_7, window_bounds = array<i64: 128, 128>}, {pipeline_mode = #tpu.pipeline_mode<synchronous>, transform_indices = @transform_8, window_bounds = array<i64: 1, 128>}, {transform_indices = @transform_9, window_bounds = array<i64: 256, 128>}]} {
    %c0 = arith.constant 0 : index
    %c0_0 = arith.constant 0 : index
    %0 = vector.load %arg1[%c0, %c0_0] : memref<256x128xf32, #tpu.memory_space<vmem>>, vector<256x128xf32>
    %c0_1 = arith.constant 0 : index
    %c0_2 = arith.constant 0 : index
    %1 = vector.load %arg2[%c0_1, %c0_2] : memref<128x128xf32, #tpu.memory_space<vmem>>, vector<128x128xf32>
    %cst = arith.constant dense<0.000000e+00> : vector<256x128xf32>
    %2 = tpu.matmul %0, %1, %cst {dimension_numbers = #tpu.dot_dimension_numbers<[1], [0], [0], [1], [0, 0, 1, 1], [], []>} : vector<256x128xf32>, vector<128x128xf32>, vector<256x128xf32> -> vector<256x128xf32>
    %c0_3 = arith.constant 0 : index
    %c0_4 = arith.constant 0 : index
    %3 = vector.load %arg3[%c0_3, %c0_4] : memref<1x128xf32, #tpu.memory_space<vmem>>, vector<1x128xf32>
    %4 = vector.broadcast %3 : vector<1x128xf32> to vector<256x128xf32>
    %5 = arith.addf %2, %4 : vector<256x128xf32>
    %cst_5 = arith.constant 0.000000e+00 : f32
    %6 = vector.broadcast %cst_5 : f32 to vector<256x128xf32>
    %7 = arith.maximumf %5, %6 : vector<256x128xf32>
    %c0_6 = arith.constant 0 : index
    %c0_7 = arith.constant 0 : index
    %8 = vector.load %arg4[%c0_6, %c0_7] : memref<128x256xf32, #tpu.memory_space<vmem>>, vector<128x256xf32>
    %cst_8 = arith.constant dense<0.000000e+00> : vector<256x256xf32>
    %9 = tpu.matmul %7, %8, %cst_8 {dimension_numbers = #tpu.dot_dimension_numbers<[1], [0], [0], [1], [0, 0, 1, 1], [], []>} : vector<256x128xf32>, vector<128x256xf32>, vector<256x256xf32> -> vector<256x256xf32>
    %c0_9 = arith.constant 0 : index
    %c0_10 = arith.constant 0 : index
    %10 = vector.load %arg5[%c0_9, %c0_10] : memref<1x256xf32, #tpu.memory_space<vmem>>, vector<1x256xf32>
    %11 = vector.broadcast %10 : vector<1x256xf32> to vector<256x256xf32>
    %12 = arith.addf %9, %11 : vector<256x256xf32>
    %cst_11 = arith.constant 0.000000e+00 : f32
    %13 = vector.broadcast %cst_11 : f32 to vector<256x256xf32>
    %14 = arith.maximumf %12, %13 : vector<256x256xf32>
    %c0_12 = arith.constant 0 : index
    %c0_13 = arith.constant 0 : index
    %15 = vector.load %arg6[%c0_12, %c0_13] : memref<256x128xf32, #tpu.memory_space<vmem>>, vector<256x128xf32>
    %cst_14 = arith.constant dense<0.000000e+00> : vector<256x128xf32>
    %16 = tpu.matmul %14, %15, %cst_14 {dimension_numbers = #tpu.dot_dimension_numbers<[1], [0], [0], [1], [0, 0, 1, 1], [], []>} : vector<256x256xf32>, vector<256x128xf32>, vector<256x128xf32> -> vector<256x128xf32>
    %c0_15 = arith.constant 0 : index
    %c0_16 = arith.constant 0 : index
    %17 = vector.load %arg7[%c0_15, %c0_16] : memref<1x128xf32, #tpu.memory_space<vmem>>, vector<1x128xf32>
    %18 = vector.broadcast %17 : vector<1x128xf32> to vector<256x128xf32>
    %19 = arith.addf %16, %18 : vector<256x128xf32>
    %cst_17 = arith.constant 0.000000e+00 : f32
    %20 = vector.broadcast %cst_17 : f32 to vector<256x128xf32>
    %21 = arith.maximumf %19, %20 : vector<256x128xf32>
    %c0_18 = arith.constant 0 : index
    %c0_19 = arith.constant 0 : index
    %22 = vector.load %arg8[%c0_18, %c0_19] : memref<128x128xf32, #tpu.memory_space<vmem>>, vector<128x128xf32>
    %cst_20 = arith.constant dense<0.000000e+00> : vector<256x128xf32>
    %23 = tpu.matmul %21, %22, %cst_20 {dimension_numbers = #tpu.dot_dimension_numbers<[1], [0], [0], [1], [0, 0, 1, 1], [], []>} : vector<256x128xf32>, vector<128x128xf32>, vector<256x128xf32> -> vector<256x128xf32>
    %c0_21 = arith.constant 0 : index
    %c0_22 = arith.constant 0 : index
    %24 = vector.load %arg9[%c0_21, %c0_22] : memref<1x128xf32, #tpu.memory_space<vmem>>, vector<1x128xf32>
    %25 = vector.broadcast %24 : vector<1x128xf32> to vector<256x128xf32>
    %26 = arith.addf %23, %25 : vector<256x128xf32>
    %c0_23 = arith.constant 0 : index
    %c0_24 = arith.constant 0 : index
    %27 = vector.load %arg10[%c0_23, %c0_24] : memref<256x128xf32, #tpu.memory_space<vmem>>, vector<256x128xf32>
    tpu.vector_store %arg10[%c0_23, %c0_24], %26 {strides = array<i32>} : memref<256x128xf32, #tpu.memory_space<vmem>>, vector<256x128xf32>,
    return
  }
  func.func @transform_0(%arg0: i32) -> (i32, i32) {
    %c0_i32 = arith.constant 0 : i32
    %c0_i32_0 = arith.constant 0 : i32
    return %arg0, %c0_i32 : i32, i32
  }
  func.func @transform_1(%arg0: i32) -> (i32, i32) {
    %c0_i32 = arith.constant 0 : i32
    %c0_i32_0 = arith.constant 0 : i32
    %c0_i32_1 = arith.constant 0 : i32
    return %c0_i32, %c0_i32_0 : i32, i32
  }
  func.func @transform_2(%arg0: i32) -> (i32, i32) {
    %c0_i32 = arith.constant 0 : i32
    %c0_i32_0 = arith.constant 0 : i32
    %c0_i32_1 = arith.constant 0 : i32
    return %c0_i32, %c0_i32_0 : i32, i32
  }
  func.func @transform_3(%arg0: i32) -> (i32, i32) {
    %c0_i32 = arith.constant 0 : i32
    %c0_i32_0 = arith.constant 0 : i32
    %c0_i32_1 = arith.constant 0 : i32
    return %c0_i32, %c0_i32_0 : i32, i32
  }
  func.func @transform_4(%arg0: i32) -> (i32, i32) {
    %c0_i32 = arith.constant 0 : i32
    %c0_i32_0 = arith.constant 0 : i32
    %c0_i32_1 = arith.constant 0 : i32
    return %c0_i32, %c0_i32_0 : i32, i32
  }
  func.func @transform_5(%arg0: i32) -> (i32, i32) {
    %c0_i32 = arith.constant 0 : i32
    %c0_i32_0 = arith.constant 0 : i32
    %c0_i32_1 = arith.constant 0 : i32
    return %c0_i32, %c0_i32_0 : i32, i32
  }
  func.func @transform_6(%arg0: i32) -> (i32, i32) {
    %c0_i32 = arith.constant 0 : i32
    %c0_i32_0 = arith.constant 0 : i32
    %c0_i32_1 = arith.constant 0 : i32
    return %c0_i32, %c0_i32_0 : i32, i32
  }
  func.func @transform_7(%arg0: i32) -> (i32, i32) {
    %c0_i32 = arith.constant 0 : i32
    %c0_i32_0 = arith.constant 0 : i32
    %c0_i32_1 = arith.constant 0 : i32
    return %c0_i32, %c0_i32_0 : i32, i32
  }
  func.func @transform_8(%arg0: i32) -> (i32, i32) {
    %c0_i32 = arith.constant 0 : i32
    %c0_i32_0 = arith.constant 0 : i32
    %c0_i32_1 = arith.constant 0 : i32
    return %c0_i32, %c0_i32_0 : i32, i32
  }
  func.func @transform_9(%arg0: i32) -> (i32, i32) {
    %c0_i32 = arith.constant 0 : i32
    %c0_i32_0 = arith.constant 0 : i32
    return %arg0, %c0_i32 : i32, i32
  }
}

</mosaic_0001>

<llo_original>
// kernel: tpu_custom_call.1
$region0: #{tpu_custom_call.1}
  #allocation0 [shape = 'u32[]', space=smem, size = 0x4, offset = 0x4, fixed_abs, tag = 'smem constant byte address 0x4 - core index']
  #allocation1 [shape = 'u32[144,128]{1,0:T(1,128)}', space=vmem, size = 0x12000, scoped, tag = 'internal scratch']
  %s0 = inlined_call_operand.hbm [shape: f32[512,128], index: 0, kind: input, shape index: {}]
  %s1 = inlined_call_operand.hbm [shape: f32[128,128], index: 1, kind: input, shape index: {}]
  %s2 = inlined_call_operand.vmem [shape: f32[1,128], index: 2, kind: input, shape index: {}]
  %s3 = inlined_call_operand.hbm [shape: f32[128,256], index: 3, kind: input, shape index: {}]
  %s4 = inlined_call_operand.vmem [shape: f32[1,256], index: 4, kind: input, shape index: {}]
  %s5 = inlined_call_operand.hbm [shape: f32[256,128], index: 5, kind: input, shape index: {}]
  %s6 = inlined_call_operand.vmem [shape: f32[1,128], index: 6, kind: input, shape index: {}]
  %s7 = inlined_call_operand.hbm [shape: f32[128,128], index: 7, kind: input, shape index: {}]
  %s8 = inlined_call_operand.vmem [shape: f32[1,128], index: 8, kind: input, shape index: {}]
  %s9 = inlined_call_operand.hbm [shape: f32[512,128], index: 9, kind: output, shape index: {}]
  %s10 = sld [smem:[#allocation0]]
  $region89: #{tpu_custom_call.1} parent=0
    _
  %s12 = ssub.s32 1, %s10
  %s13 = scalar_select 0, %s12, %s10
  $region1: #{tpu_custom_call.1} parent=0
    #allocation2 [shape = 'u8[262144]{0}', space=vmem, size = 0x40000, scoped, tag = 'input window, operand 0']
    #allocation3 [shape = 's32[2]{0}', space=sflag, size = 0x8, scoped, tag = 'scoped memory for tpu_custom_call.1']
    #allocation4 [shape = 's32[2]{0}', space=sflag, size = 0x8, scoped, tag = 'scoped memory for tpu_custom_call.1']
    #allocation5 [shape = 'u8[65536]{0}', space=vmem, size = 0x10000, scoped, tag = 'input window, operand 1, single buffered']
    #allocation6 [shape = 's32[1]{0}', space=sflag, size = 0x4, scoped, tag = 'scoped memory for tpu_custom_call.1']
    #allocation7 [shape = 'u8[131072]{0}', space=vmem, size = 0x20000, scoped, tag = 'input window, operand 3, single buffered']
    #allocation8 [shape = 'u8[131072]{0}', space=vmem, size = 0x20000, scoped, tag = 'input window, operand 5, single buffered']
    #allocation9 [shape = 's32[1]{0}', space=sflag, size = 0x4, scoped, tag = 'scoped memory for tpu_custom_call.1']
    #allocation10 [shape = 'u8[65536]{0}', space=vmem, size = 0x10000, scoped, tag = 'input window, operand 7, single buffered']
    #allocation11 [shape = 'u8[262144]{0}', space=vmem, size = 0x40000, scoped, tag = 'output window, operand 0']
    %14 = vsyncpa [#allocation3], 0
    %s15 = scalar_lea.sflag [#allocation3], 1
    %16 = vsyncpa %s15, 0
    %17 = vsyncpa [#allocation6], 0
    %18 = vsyncpa [#allocation9], 0
    %19 = vsyncpa [#allocation4], 0
    %s20 = scalar_lea.sflag [#allocation4], 1
    %21 = vsyncpa %s20, 0
    loop: start=0, step=1, limit=4
    $region2: #{tpu_custom_call.1} parent=1 // loop_pre_header
      _
    $region3: #{tpu_custom_call.1} parent=1 // loop_header
      %s23 = sphi 0, %s27
      %p24 = scmp.ge.s32.totalorder %s23, 4
      %s33 = sphi 0, %s35
      %s36 = sphi 0, %s33
      %s37 = sphi 0, %s36
      %s53 = sphi 0, %s37
      %s57 = sphi 0, %s57
      %s59 = sphi 0, %s57
      %s60 = sphi 0, %s59
      %s74 = sphi 0, %s60
      %s78 = sphi 0, %s78
      %s80 = sphi 0, %s78
      %s81 = sphi 0, %s80
      %s95 = sphi 0, %s81
      %s99 = sphi 0, %s99
      %s101 = sphi 0, %s99
      %s102 = sphi 0, %s101
      %s116 = sphi 0, %s102
      %s120 = sphi 0, %s120
      %s122 = sphi 0, %s120
      %s123 = sphi 0, %s122
      %s137 = sphi 0, %s123
      %s141 = sphi 0, %s141
      %s143 = sphi 0, %s141
      %s144 = sphi 0, %s143
      %s158 = sphi 0, %s144
      %s162 = sphi 0, %s162
      %s164 = sphi 0, %s162
      %s165 = sphi 0, %s164
      %s179 = sphi 0, %s165
      %s183 = sphi 0, %s183
      %s185 = sphi 0, %s183
      %s186 = sphi 0, %s185
      %s200 = sphi 0, %s186
      %s204 = sphi 0, %s204
      %s206 = sphi 0, %s204
      %s207 = sphi 0, %s206
      %s221 = sphi 0, %s207
      %s227 = sphi 0, %s229
      %s230 = sphi 0, %s227
      %s231 = sphi 0, %s230
      %s247 = sphi 0, %s231
    $region4: #{tpu_custom_call.1} parent=1 // loop_header_branch
      %26 = sbr.rel (%p24) target = $region8
    $region5: #{tpu_custom_call.1} parent=1 // loop_body
      %s28 = ssub.s32 %s23, 1
      %s29 = ssub.s32 %s23, 2
      %s30 = sadd.s32 %s23, 1
      %s31 = ssub.s32 %s23, %s30
      %p32 = scmp.eq.s32.totalorder %s31, 0
      %s34 = sadd.s32 %s33, 1
      %s35 = scalar_select %p32, %s33, %s34
      %p38 = pneg %p32
      %p39 = scmp.eq.s32.totalorder %s23, 1
      %p40 = por %p38, %p39
      %p41 = scmp.ne.s32.totalorder %s33, %s36
      %p42 = scmp.eq.s32.totalorder %s23, 0
      %p43 = por %p41, %p42
      %p44 = scmp.ne.s32.totalorder %s33, %s36
      %p45 = scmp.eq.s32.totalorder %s28, 1
      %p46 = por %p44, %p45
      %p47 = scmp.ne.s32.totalorder %s36, %s37
      %p48 = scmp.eq.s32.totalorder %s28, 0
      %p49 = por %p47, %p48
      %p50 = scmp.ne.s32.totalorder %s36, %s37
      %p51 = scmp.eq.s32.totalorder %s29, 1
      %p52 = por %p50, %p51
      %p54 = scmp.ne.s32.totalorder %s37, %s53
      %p55 = scmp.eq.s32.totalorder %s29, 0
      %p56 = por %p54, %p55
      %s58 = sadd.s32 %s57, 1
      %p61 = scmp.eq.s32.totalorder %s23, 1
      %p62 = scmp.ne.s32.totalorder %s57, %s59
      %p63 = scmp.eq.s32.totalorder %s23, 0
      %p64 = por %p62, %p63
      %p65 = scmp.ne.s32.totalorder %s57, %s59
      %p66 = scmp.eq.s32.totalorder %s28, 1
      %p67 = por %p65, %p66
      %p68 = scmp.ne.s32.totalorder %s59, %s60
      %p69 = scmp.eq.s32.totalorder %s28, 0
      %p70 = por %p68, %p69
      %p71 = scmp.ne.s32.totalorder %s59, %s60
      %p72 = scmp.eq.s32.totalorder %s29, 1
      %p73 = por %p71, %p72
      %p75 = scmp.ne.s32.totalorder %s60, %s74
      %p76 = scmp.eq.s32.totalorder %s29, 0
      %p77 = por %p75, %p76
      %s79 = sadd.s32 %s78, 1
      %p82 = scmp.eq.s32.totalorder %s23, 1
      %p83 = scmp.ne.s32.totalorder %s78, %s80
      %p84 = scmp.eq.s32.totalorder %s23, 0
      %p85 = por %p83, %p84
      %p86 = scmp.ne.s32.totalorder %s78, %s80
      %p87 = scmp.eq.s32.totalorder %s28, 1
      %p88 = por %p86, %p87
      %p89 = scmp.ne.s32.totalorder %s80, %s81
      %p90 = scmp.eq.s32.totalorder %s28, 0
      %p91 = por %p89, %p90
      %p92 = scmp.ne.s32.totalorder %s80, %s81
      %p93 = scmp.eq.s32.totalorder %s29, 1
      %p94 = por %p92, %p93
      %p96 = scmp.ne.s32.totalorder %s81, %s95
      %p97 = scmp.eq.s32.totalorder %s29, 0
      %p98 = por %p96, %p97
      %s100 = sadd.s32 %s99, 1
      %p103 = scmp.eq.s32.totalorder %s23, 1
      %p104 = scmp.ne.s32.totalorder %s99, %s101
      %p105 = scmp.eq.s32.totalorder %s23, 0
      %p106 = por %p104, %p105
      %p107 = scmp.ne.s32.totalorder %s99, %s101
      %p108 = scmp.eq.s32.totalorder %s28, 1
      %p109 = por %p107, %p108
      %p110 = scmp.ne.s32.totalorder %s101, %s102
      %p111 = scmp.eq.s32.totalorder %s28, 0
      %p112 = por %p110, %p111
      %p113 = scmp.ne.s32.totalorder %s101, %s102
      %p114 = scmp.eq.s32.totalorder %s29, 1
      %p115 = por %p113, %p114
      %p117 = scmp.ne.s32.totalorder %s102, %s116
      %p118 = scmp.eq.s32.totalorder %s29, 0
      %p119 = por %p117, %p118
      %s121 = sadd.s32 %s120, 1
      %p124 = scmp.eq.s32.totalorder %s23, 1
      %p125 = scmp.ne.s32.totalorder %s120, %s122
      %p126 = scmp.eq.s32.totalorder %s23, 0
      %p127 = por %p125, %p126
      %p128 = scmp.ne.s32.totalorder %s120, %s122
      %p129 = scmp.eq.s32.totalorder %s28, 1
      %p130 = por %p128, %p129
      %p131 = scmp.ne.s32.totalorder %s122, %s123
      %p132 = scmp.eq.s32.totalorder %s28, 0
      %p133 = por %p131, %p132
      %p134 = scmp.ne.s32.totalorder %s122, %s123
      %p135 = scmp.eq.s32.totalorder %s29, 1
      %p136 = por %p134, %p135
      %p138 = scmp.ne.s32.totalorder %s123, %s137
      %p139 = scmp.eq.s32.totalorder %s29, 0
      %p140 = por %p138, %p139
      %s142 = sadd.s32 %s141, 1
      %p145 = scmp.eq.s32.totalorder %s23, 1
      %p146 = scmp.ne.s32.totalorder %s141, %s143
      %p147 = scmp.eq.s32.totalorder %s23, 0
      %p148 = por %p146, %p147
      %p149 = scmp.ne.s32.totalorder %s141, %s143
      %p150 = scmp.eq.s32.totalorder %s28, 1
      %p151 = por %p149, %p150
      %p152 = scmp.ne.s32.totalorder %s143, %s144
      %p153 = scmp.eq.s32.totalorder %s28, 0
      %p154 = por %p152, %p153
      %p155 = scmp.ne.s32.totalorder %s143, %s144
      %p156 = scmp.eq.s32.totalorder %s29, 1
      %p157 = por %p155, %p156
      %p159 = scmp.ne.s32.totalorder %s144, %s158
      %p160 = scmp.eq.s32.totalorder %s29, 0
      %p161 = por %p159, %p160
      %s163 = sadd.s32 %s162, 1
      %p166 = scmp.eq.s32.totalorder %s23, 1
      %p167 = scmp.ne.s32.totalorder %s162, %s164
      %p168 = scmp.eq.s32.totalorder %s23, 0
      %p169 = por %p167, %p168
      %p170 = scmp.ne.s32.totalorder %s162, %s164
      %p171 = scmp.eq.s32.totalorder %s28, 1
      %p172 = por %p170, %p171
      %p173 = scmp.ne.s32.totalorder %s164, %s165
      %p174 = scmp.eq.s32.totalorder %s28, 0
      %p175 = por %p173, %p174
      %p176 = scmp.ne.s32.totalorder %s164, %s165
      %p177 = scmp.eq.s32.totalorder %s29, 1
      %p178 = por %p176, %p177
      %p180 = scmp.ne.s32.totalorder %s165, %s179
      %p181 = scmp.eq.s32.totalorder %s29, 0
      %p182 = por %p180, %p181
      %s184 = sadd.s32 %s183, 1
      %p187 = scmp.eq.s32.totalorder %s23, 1
      %p188 = scmp.ne.s32.totalorder %s183, %s185
      %p189 = scmp.eq.s32.totalorder %s23, 0
      %p190 = por %p188, %p189
      %p191 = scmp.ne.s32.totalorder %s183, %s185
      %p192 = scmp.eq.s32.totalorder %s28, 1
      %p193 = por %p191, %p192
      %p194 = scmp.ne.s32.totalorder %s185, %s186
      %p195 = scmp.eq.s32.totalorder %s28, 0
      %p196 = por %p194, %p195
      %p197 = scmp.ne.s32.totalorder %s185, %s186
      %p198 = scmp.eq.s32.totalorder %s29, 1
      %p199 = por %p197, %p198
      %p201 = scmp.ne.s32.totalorder %s186, %s200
      %p202 = scmp.eq.s32.totalorder %s29, 0
      %p203 = por %p201, %p202
      %s205 = sadd.s32 %s204, 1
      %p208 = scmp.eq.s32.totalorder %s23, 1
      %p209 = scmp.ne.s32.totalorder %s204, %s206
      %p210 = scmp.eq.s32.totalorder %s23, 0
      %p211 = por %p209, %p210
      %p212 = scmp.ne.s32.totalorder %s204, %s206
      %p213 = scmp.eq.s32.totalorder %s28, 1
      %p214 = por %p212, %p213
      %p215 = scmp.ne.s32.totalorder %s206, %s207
      %p216 = scmp.eq.s32.totalorder %s28, 0
      %p217 = por %p215, %p216
      %p218 = scmp.ne.s32.totalorder %s206, %s207
      %p219 = scmp.eq.s32.totalorder %s29, 1
      %p220 = por %p218, %p219
      %p222 = scmp.ne.s32.totalorder %s207, %s221
      %p223 = scmp.eq.s32.totalorder %s29, 0
      %p224 = por %p222, %p223
      %s225 = ssub.s32 %s23, %s30
      %p226 = scmp.eq.s32.totalorder %s225, 0
      %s228 = sadd.s32 %s227, 1
      %s229 = scalar_select %p226, %s227, %s228
      %p232 = pneg %p226
      %p233 = scmp.eq.s32.totalorder %s23, 1
      %p234 = por %p232, %p233
      %p235 = scmp.ne.s32.totalorder %s227, %s230
      %p236 = scmp.eq.s32.totalorder %s23, 0
      %p237 = por %p235, %p236
      %p238 = scmp.ne.s32.totalorder %s227, %s230
      %p239 = scmp.eq.s32.totalorder %s28, 1
      %p240 = por %p238, %p239
      %p241 = scmp.ne.s32.totalorder %s230, %s231
      %p242 = scmp.eq.s32.totalorder %s28, 0
      %p243 = por %p241, %p242
      %p244 = scmp.ne.s32.totalorder %s230, %s231
      %p245 = scmp.eq.s32.totalorder %s29, 1
      %p246 = por %p244, %p245
      %p248 = scmp.ne.s32.totalorder %s231, %s247
      %p249 = scmp.eq.s32.totalorder %s29, 0
      %p250 = por %p248, %p249
      %p251 = scmp.le.s32.totalorder 1, %s23
      %p252 = scmp.lt.s32.totalorder %s23, 3
      %p253 = pnand %p251, %p252
      %p254 = pneg %p253
      // Predicated region
      $region9: #{tpu_custom_call.1} parent=5 // pred_check
        _
      $region10: #{tpu_custom_call.1} parent=5 // pred_check_branch
        %256 = sbr.rel (%p253) target = $region12
      $region11: #{tpu_custom_call.1} parent=5 // pred_region
        %s257 = ssub.s32 %s23, 1
        // Predicated region
        $region13: #{tpu_custom_call.1} parent=11 // pred_check
          %p258 = pneg %p70
        $region14: #{tpu_custom_call.1} parent=11 // pred_check_branch
          %260 = sbr.rel (%p258) target = $region16
        $region15: #{tpu_custom_call.1} parent=11 // pred_region
          %s262 = ssub.s32 2048, 2048
          %263 = vsyncadd [#allocation6], %s262
          %s264 = sshll.u32 [#allocation5], 4
          %s265 = int_to_ptr.vmem [resolvable:$true] %s264
          %270 = dma.hbm_to_vmem [thread:$0]  %s1, 2048, %s265, [#allocation6], 128, 128, 8
        $region16: #{tpu_custom_call.1} parent=11 // pred_fallthru
          _
        // Predicated region
        $region17: #{tpu_custom_call.1} parent=11 // pred_check
          %p271 = pneg %p91
        $region18: #{tpu_custom_call.1} parent=11 // pred_check_branch
          %273 = sbr.rel (%p271) target = $region20
        $region19: #{tpu_custom_call.1} parent=11 // pred_region
          _
        $region20: #{tpu_custom_call.1} parent=11 // pred_fallthru
          _
        // Predicated region
        $region21: #{tpu_custom_call.1} parent=11 // pred_check
          %p274 = pneg %p112
        $region22: #{tpu_custom_call.1} parent=11 // pred_check_branch
          %276 = sbr.rel (%p274) target = $region24
        $region23: #{tpu_custom_call.1} parent=11 // pred_region
          %s278 = ssub.s32 4096, 4096
          %279 = vsyncadd [#allocation6], %s278
          %s280 = sshll.u32 [#allocation7], 4
          %s281 = int_to_ptr.vmem [resolvable:$true] %s280
          %286 = dma.hbm_to_vmem [thread:$0]  %s3, 4096, %s281, [#allocation6], 256, 256, 16
        $region24: #{tpu_custom_call.1} parent=11 // pred_fallthru
          _
        // Predicated region
        $region25: #{tpu_custom_call.1} parent=11 // pred_check
          %p287 = pneg %p133
        $region26: #{tpu_custom_call.1} parent=11 // pred_check_branch
          %289 = sbr.rel (%p287) target = $region28
        $region27: #{tpu_custom_call.1} parent=11 // pred_region
          _
        $region28: #{tpu_custom_call.1} parent=11 // pred_fallthru
          _
        // Predicated region
        $region29: #{tpu_custom_call.1} parent=11 // pred_check
          %p290 = pneg %p154
        $region30: #{tpu_custom_call.1} parent=11 // pred_check_branch
          %292 = sbr.rel (%p290) target = $region32
        $region31: #{tpu_custom_call.1} parent=11 // pred_region
          %s294 = ssub.s32 4096, 4096
          %295 = vsyncadd [#allocation9], %s294
          %s296 = sshll.u32 [#allocation8], 4
          %s297 = int_to_ptr.vmem [resolvable:$true] %s296
          %302 = dma.hbm_to_vmem [thread:$0]  %s5, 4096, %s297, [#allocation9], 128, 128, 8
        $region32: #{tpu_custom_call.1} parent=11 // pred_fallthru
          _
        // Predicated region
        $region33: #{tpu_custom_call.1} parent=11 // pred_check
          %p303 = pneg %p175
        $region34: #{tpu_custom_call.1} parent=11 // pred_check_branch
          %305 = sbr.rel (%p303) target = $region36
        $region35: #{tpu_custom_call.1} parent=11 // pred_region
          _
        $region36: #{tpu_custom_call.1} parent=11 // pred_fallthru
          _
        // Predicated region
        $region37: #{tpu_custom_call.1} parent=11 // pred_check
          %p306 = pneg %p196
        $region38: #{tpu_custom_call.1} parent=11 // pred_check_branch
          %308 = sbr.rel (%p306) target = $region40
        $region39: #{tpu_custom_call.1} parent=11 // pred_region
          %s310 = ssub.s32 2048, 2048
          %311 = vsyncadd [#allocation9], %s310
          %s312 = sshll.u32 [#allocation10], 4
          %s313 = int_to_ptr.vmem [resolvable:$true] %s312
          %318 = dma.hbm_to_vmem [thread:$0]  %s7, 2048, %s313, [#allocation9], 128, 128, 8
        $region40: #{tpu_custom_call.1} parent=11 // pred_fallthru
          _
        // Predicated region
        $region41: #{tpu_custom_call.1} parent=11 // pred_check
          %p319 = pneg %p217
        $region42: #{tpu_custom_call.1} parent=11 // pred_check_branch
          %321 = sbr.rel (%p319) target = $region44
        $region43: #{tpu_custom_call.1} parent=11 // pred_region
          _
        $region44: #{tpu_custom_call.1} parent=11 // pred_fallthru
          _
      $region12: #{tpu_custom_call.1} parent=5 // pred_fallthru
        _
      %p322 = scmp.lt.s32.totalorder %s23, 2
      // Predicated region
      $region45: #{tpu_custom_call.1} parent=5 // pred_check
        %p323 = pneg %p322
      $region46: #{tpu_custom_call.1} parent=5 // pred_check_branch
        %325 = sbr.rel (%p323) target = $region48
      $region47: #{tpu_custom_call.1} parent=5 // pred_region
        // Predicated region
        $region49: #{tpu_custom_call.1} parent=47 // pred_check
          %p326 = pneg %p43
        $region50: #{tpu_custom_call.1} parent=47 // pred_check_branch
          %328 = sbr.rel (%p326) target = $region52
        $region51: #{tpu_custom_call.1} parent=47 // pred_region
          %s329 = sand.u32 %s33, 1
          %s330 = scalar_lea.sflag [#allocation3], %s329
          %s331 = sand.u32 %s33, 1
          %s332 = smul.addr %s331, 256
          %s333 = scalar_lea.vmem [#allocation2], %s332
          %s334 = smul.u32 32, %s23
          %s336 = ssub.s32 4096, 4096
          %337 = vsyncadd %s330, %s336
          %s338 = smul.addr %s334, 128
          %s339 = scalar_lea.hbm %s0, %s338
          %s340 = sshll.u32 %s333, 4
          %s341 = int_to_ptr.vmem [resolvable:$true] %s340
          %346 = dma.hbm_to_vmem [thread:$0]  %s339, 4096, %s341, %s330, 128, 128, 8
        $region52: #{tpu_custom_call.1} parent=47 // pred_fallthru
          _
      $region48: #{tpu_custom_call.1} parent=5 // pred_fallthru
        _
      %p347 = scmp.le.s32.totalorder 1, %s23
      %p348 = scmp.lt.s32.totalorder %s23, 3
      %p349 = pnand %p347, %p348
      %p350 = pneg %p349
      // Predicated region
      $region53: #{tpu_custom_call.1} parent=5 // pred_check
        _
      $region54: #{tpu_custom_call.1} parent=5 // pred_check_branch
        %352 = sbr.rel (%p349) target = $region56
      $region55: #{tpu_custom_call.1} parent=5 // pred_region
        %s353 = ssub.s32 %s23, 1
        %s354 = sand.u32 %s36, 1
        %s355 = scalar_lea.sflag [#allocation3], %s354
        %s356 = sand.u32 %s36, 1
        %s357 = smul.addr %s356, 256
        %s358 = scalar_lea.vmem [#allocation2], %s357
        // Predicated region
        $region57: #{tpu_custom_call.1} parent=55 // pred_check
          %p359 = pneg %p49
        $region58: #{tpu_custom_call.1} parent=55 // pred_check_branch
          %361 = sbr.rel (%p359) target = $region60
        $region59: #{tpu_custom_call.1} parent=55 // pred_region
          %362 = dma.done %s355, 4096
        $region60: #{tpu_custom_call.1} parent=55 // pred_fallthru
          _
        // Predicated region
        $region61: #{tpu_custom_call.1} parent=55 // pred_check
          %p363 = pneg %p70
        $region62: #{tpu_custom_call.1} parent=55 // pred_check_branch
          %365 = sbr.rel (%p363) target = $region64
        $region63: #{tpu_custom_call.1} parent=55 // pred_region
          %366 = dma.done [#allocation6], 2048
        $region64: #{tpu_custom_call.1} parent=55 // pred_fallthru
          _
        // Predicated region
        $region65: #{tpu_custom_call.1} parent=55 // pred_check
          %p367 = pneg %p112
        $region66: #{tpu_custom_call.1} parent=55 // pred_check_branch
          %369 = sbr.rel (%p367) target = $region68
        $region67: #{tpu_custom_call.1} parent=55 // pred_region
          %370 = dma.done [#allocation6], 4096
        $region68: #{tpu_custom_call.1} parent=55 // pred_fallthru
          _
        // Predicated region
        $region69: #{tpu_custom_call.1} parent=55 // pred_check
          %p371 = pneg %p154
        $region70: #{tpu_custom_call.1} parent=55 // pred_check_branch
          %373 = sbr.rel (%p371) target = $region72
        $region71: #{tpu_custom_call.1} parent=55 // pred_region
          %374 = dma.done [#allocation9], 4096
        $region72: #{tpu_custom_call.1} parent=55 // pred_fallthru
          _
        // Predicated region
        $region73: #{tpu_custom_call.1} parent=55 // pred_check
          %p375 = pneg %p196
        $region74: #{tpu_custom_call.1} parent=55 // pred_check_branch
          %377 = sbr.rel (%p375) target = $region76
        $region75: #{tpu_custom_call.1} parent=55 // pred_region
          %378 = dma.done [#allocation9], 2048
        $region76: #{tpu_custom_call.1} parent=55 // pred_fallthru
          _
        %s379 = sand.u32 %s36, 1
        %s380 = scalar_lea.sflag [#allocation3], %s379
        %s381 = sand.u32 %s36, 1
        %s382 = smul.addr %s381, 256
        %s383 = scalar_lea.vmem [#allocation2], %s382
        %p384 = pneg %p49
        %p385 = pneg %p46
        %p386 = pneg %p70
        %p387 = pneg %p67
        %p388 = pneg %p91
        %p389 = pneg %p88
        %p390 = pneg %p112
        %p391 = pneg %p109
        %p392 = pneg %p133
        %p393 = pneg %p130
        %p394 = pneg %p154
        %p395 = pneg %p151
        %p396 = pneg %p175
        %p397 = pneg %p172
        %p398 = pneg %p196
        %p399 = pneg %p193
        %p400 = pneg %p217
        %p401 = pneg %p214
        %p402 = pneg %p243
        %p403 = pneg %p240
        %s404 = sand.u32 %s230, 1
        %s405 = scalar_lea.sflag [#allocation4], %s404
        %s406 = sand.u32 %s230, 1
        %s407 = smul.addr %s406, 256
        %s408 = scalar_lea.vmem [#allocation11], %s407
        %s409 = smul.u32 32, %s28
        %s410 = smul.u32 32, %s28
        %v411 = vld [vmem:[%s358] sm:$0xff]
        %v412 = vld [vmem:[%s358 + $0x8] sm:$0xff]
        %v413 = vld [vmem:[%s358 + $0x10] sm:$0xff]
        %v414 = vld [vmem:[%s358 + $0x18] sm:$0xff]
        %v415 = vld [vmem:[%s358 + $0x20] sm:$0xff]
        %v416 = vld [vmem:[%s358 + $0x28] sm:$0xff]
        %v417 = vld [vmem:[%s358 + $0x30] sm:$0xff]
        %v418 = vld [vmem:[%s358 + $0x38] sm:$0xff]
        %v419 = vld [vmem:[%s358 + $0x40] sm:$0xff]
        %v420 = vld [vmem:[%s358 + $0x48] sm:$0xff]
        %v421 = vld [vmem:[%s358 + $0x50] sm:$0xff]
        %v422 = vld [vmem:[%s358 + $0x58] sm:$0xff]
        %v423 = vld [vmem:[%s358 + $0x60] sm:$0xff]
        %v424 = vld [vmem:[%s358 + $0x68] sm:$0xff]
        %v425 = vld [vmem:[%s358 + $0x70] sm:$0xff]
        %v426 = vld [vmem:[%s358 + $0x78] sm:$0xff]
        %v427 = vld [vmem:[%s358 + $0x80] sm:$0xff]
        %v428 = vld [vmem:[%s358 + $0x88] sm:$0xff]
        %v429 = vld [vmem:[%s358 + $0x90] sm:$0xff]
        %v430 = vld [vmem:[%s358 + $0x98] sm:$0xff]
        %v431 = vld [vmem:[%s358 + $0xa0] sm:$0xff]
        %v432 = vld [vmem:[%s358 + $0xa8] sm:$0xff]
        %v433 = vld [vmem:[%s358 + $0xb0] sm:$0xff]
        %v434 = vld [vmem:[%s358 + $0xb8] sm:$0xff]
        %v435 = vld [vmem:[%s358 + $0xc0] sm:$0xff]
        %v436 = vld [vmem:[%s358 + $0xc8] sm:$0xff]
        %v437 = vld [vmem:[%s358 + $0xd0] sm:$0xff]
        %v438 = vld [vmem:[%s358 + $0xd8] sm:$0xff]
        %v439 = vld [vmem:[%s358 + $0xe0] sm:$0xff]
        %v440 = vld [vmem:[%s358 + $0xe8] sm:$0xff]
        %v441 = vld [vmem:[%s358 + $0xf0] sm:$0xff]
        %v442 = vld [vmem:[%s358 + $0xf8] sm:$0xff]
        %v443 = vld [vmem:[#allocation5] sm:$0xff]
        %v444 = vld [vmem:[#allocation5 + $0x8] sm:$0xff]
        %v445 = vld [vmem:[#allocation5 + $0x10] sm:$0xff]
        %v446 = vld [vmem:[#allocation5 + $0x18] sm:$0xff]
        %v447 = vld [vmem:[#allocation5 + $0x20] sm:$0xff]
        %v448 = vld [vmem:[#allocation5 + $0x28] sm:$0xff]
        %v449 = vld [vmem:[#allocation5 + $0x30] sm:$0xff]
        %v450 = vld [vmem:[#allocation5 + $0x38] sm:$0xff]
        %v451 = vld [vmem:[#allocation5 + $0x40] sm:$0xff]
        %v452 = vld [vmem:[#allocation5 + $0x48] sm:$0xff]
        %v453 = vld [vmem:[#allocation5 + $0x50] sm:$0xff]
        %v454 = vld [vmem:[#allocation5 + $0x58] sm:$0xff]
        %v455 = vld [vmem:[#allocation5 + $0x60] sm:$0xff]
        %v456 = vld [vmem:[#allocation5 + $0x68] sm:$0xff]
        %v457 = vld [vmem:[#allocation5 + $0x70] sm:$0xff]
        %v458 = vld [vmem:[#allocation5 + $0x78] sm:$0xff]
        %v459 = vld [vmem:[%s2] sm:$0x1]
        %v461 = vlaneseq
        %v462 = vshrl.u32 %v461, 7
        %v463 = vsub.s32 0, %v462
        %v464 = vrot.slane %v459, %v463
        %466 = vmatprep.subr.mxu0 0.0
        %467 = vmatpush1.msra.mxu0 %v443
        %468 = vmatprep.subr.mxu0 0.0
        %469 = vmatpush1.msra.mxu0 %v444
        %470 = vmatprep.subr.mxu0 0.0
        %471 = vmatpush1.msra.mxu0 %v445
        %472 = vmatprep.subr.mxu0 0.0
        %473 = vmatpush1.msra.mxu0 %v446
        %474 = vmatprep.subr.mxu0 0.0
        %475 = vmatpush1.msra.mxu0 %v447
        %476 = vmatprep.subr.mxu0 0.0
        %477 = vmatpush1.msra.mxu0 %v448
        %478 = vmatprep.subr.mxu0 0.0
        %479 = vmatpush1.msra.mxu0 %v449
        %480 = vmatprep.subr.mxu0 0.0
        %481 = vmatpush1.msra.mxu0 %v450
        %482 = vmatprep.subr.mxu0 0.0
        %483 = vmatpush1.msra.mxu0 %v451
        %484 = vmatprep.subr.mxu0 0.0
        %485 = vmatpush1.msra.mxu0 %v452
        %486 = vmatprep.subr.mxu0 0.0
        %487 = vmatpush1.msra.mxu0 %v453
        %488 = vmatprep.subr.mxu0 0.0
        %489 = vmatpush1.msra.mxu0 %v454
        %490 = vmatprep.subr.mxu0 0.0
        %491 = vmatpush1.msra.mxu0 %v455
        %492 = vmatprep.subr.mxu0 0.0
        %493 = vmatpush1.msra.mxu0 %v456
        %494 = vmatprep.subr.mxu0 0.0
        %495 = vmatpush1.msra.mxu0 %v457
        %496 = vmatprep.subr.mxu0 0.0
        %497 = vmatpush1.msra.mxu0 %v458
        %498 = vmatprep.subr.mxu0 0.0
        %499 = vmatpush1.msra.mxu0 0.0
        %500 = vmatprep.subr.mxu0 0.0
        %501 = vmatpush1.msra.mxu0 0.0
        %502 = vmatprep.subr.mxu0 0.0
        %503 = vmatpush1.msra.mxu0 0.0
        %504 = vmatprep.subr.mxu0 0.0
        %505 = vmatpush1.msra.mxu0 0.0
        %506 = vmatprep.subr.mxu0 0.0
        %507 = vmatpush1.msra.mxu0 0.0
        %508 = vmatprep.subr.mxu0 0.0
        %509 = vmatpush1.msra.mxu0 0.0
        %510 = vmatprep.subr.mxu0 0.0
        %511 = vmatpush1.msra.mxu0 0.0
        %512 = vmatprep.subr.mxu0 0.0
        %513 = vmatpush1.msra.mxu0 0.0
        %514 = vmatprep.subr.mxu0 0.0
        %515 = vmatpush1.msra.mxu0 0.0
        %516 = vmatprep.subr.mxu0 0.0
        %517 = vmatpush1.msra.mxu0 0.0
        %518 = vmatprep.subr.mxu0 0.0
        %519 = vmatpush1.msra.mxu0 0.0
        %520 = vmatprep.subr.mxu0 0.0
        %521 = vmatpush1.msra.mxu0 0.0
        %522 = vmatprep.subr.mxu0 0.0
        %523 = vmatpush1.msra.mxu0 0.0
        %524 = vmatprep.subr.mxu0 0.0
        %525 = vmatpush1.msra.mxu0 0.0
        %526 = vmatprep.subr.mxu0 0.0
        %527 = vmatpush1.msra.mxu0 0.0
        %528 = vmatprep.subr.mxu0 0.0
        %529 = vmatpush1.msra.mxu0 0.0
        %530 = vmatprep.mubr.f32.mxu0 0.0
        %531 = vmatmul.mubr.f32.gmra.mrb[0].mxu0 %v411
        %v532 = vpop.f32.mrb[0].mxu0
        %v533 = vadd.f32 %v464, %v532
        %v534 = vpop.f32.mrb[0].mxu0
        %535 = vmatprep.mubr.f32.mxu0 0.0
        %536 = vmatmul.mubr.f32.gmra.mrb[0].mxu0 %v412
        %v537 = vpop.f32.mrb[0].mxu0
        %v538 = vadd.f32 %v464, %v537
        %v539 = vpop.f32.mrb[0].mxu0
        %540 = vmatprep.mubr.f32.mxu0 0.0
        %541 = vmatmul.mubr.f32.gmra.mrb[0].mxu0 %v413
        %v542 = vpop.f32.mrb[0].mxu0
        %v543 = vadd.f32 %v464, %v542
        %v544 = vpop.f32.mrb[0].mxu0
        %545 = vmatprep.mubr.f32.mxu0 0.0
        %546 = vmatmul.mubr.f32.gmra.mrb[0].mxu0 %v414
        %v547 = vpop.f32.mrb[0].mxu0
        %v548 = vadd.f32 %v464, %v547
        %v549 = vpop.f32.mrb[0].mxu0
        %550 = vmatprep.mubr.f32.mxu0 0.0
        %551 = vmatmul.mubr.f32.gmra.mrb[0].mxu0 %v415
        %v552 = vpop.f32.mrb[0].mxu0
        %v553 = vadd.f32 %v464, %v552
        %v554 = vpop.f32.mrb[0].mxu0
        %555 = vmatprep.mubr.f32.mxu0 0.0
        %556 = vmatmul.mubr.f32.gmra.mrb[0].mxu0 %v416
        %v557 = vpop.f32.mrb[0].mxu0
        %v558 = vadd.f32 %v464, %v557
        %v559 = vpop.f32.mrb[0].mxu0
        %560 = vmatprep.mubr.f32.mxu0 0.0
        %561 = vmatmul.mubr.f32.gmra.mrb[0].mxu0 %v417
        %v562 = vpop.f32.mrb[0].mxu0
        %v563 = vadd.f32 %v464, %v562
        %v564 = vpop.f32.mrb[0].mxu0
        %565 = vmatprep.mubr.f32.mxu0 0.0
        %566 = vmatmul.mubr.f32.gmra.mrb[0].mxu0 %v418
        %v567 = vpop.f32.mrb[0].mxu0
        %v568 = vadd.f32 %v464, %v567
        %v569 = vpop.f32.mrb[0].mxu0
        %570 = vmatprep.mubr.f32.mxu0 0.0
        %571 = vmatmul.mubr.f32.gmra.mrb[0].mxu0 %v419
        %v572 = vpop.f32.mrb[0].mxu0
        %v573 = vadd.f32 %v464, %v572
        %v574 = vpop.f32.mrb[0].mxu0
        %575 = vmatprep.mubr.f32.mxu0 0.0
        %576 = vmatmul.mubr.f32.gmra.mrb[0].mxu0 %v420
        %v577 = vpop.f32.mrb[0].mxu0
        %v578 = vadd.f32 %v464, %v577
        %v579 = vpop.f32.mrb[0].mxu0
        %580 = vmatprep.mubr.f32.mxu0 0.0
        %581 = vmatmul.mubr.f32.gmra.mrb[0].mxu0 %v421
        %v582 = vpop.f32.mrb[0].mxu0
        %v583 = vadd.f32 %v464, %v582
        %v584 = vpop.f32.mrb[0].mxu0
        %585 = vmatprep.mubr.f32.mxu0 0.0
        %586 = vmatmul.mubr.f32.gmra.mrb[0].mxu0 %v422
        %v587 = vpop.f32.mrb[0].mxu0
        %v588 = vadd.f32 %v464, %v587
        %v589 = vpop.f32.mrb[0].mxu0
        %590 = vmatprep.mubr.f32.mxu0 0.0
        %591 = vmatmul.mubr.f32.gmra.mrb[0].mxu0 %v423
        %v592 = vpop.f32.mrb[0].mxu0
        %v593 = vadd.f32 %v464, %v592
        %v594 = vpop.f32.mrb[0].mxu0
        %595 = vmatprep.mubr.f32.mxu0 0.0
        %596 = vmatmul.mubr.f32.gmra.mrb[0].mxu0 %v424
        %v597 = vpop.f32.mrb[0].mxu0
        %v598 = vadd.f32 %v464, %v597
        %v599 = vpop.f32.mrb[0].mxu0
        %600 = vmatprep.mubr.f32.mxu0 0.0
        %601 = vmatmul.mubr.f32.gmra.mrb[0].mxu0 %v425
        %v602 = vpop.f32.mrb[0].mxu0
        %v603 = vadd.f32 %v464, %v602
        %v604 = vpop.f32.mrb[0].mxu0
        %605 = vmatprep.mubr.f32.mxu0 0.0
        %606 = vmatmul.mubr.f32.gmra.mrb[0].mxu0 %v426
        %v607 = vpop.f32.mrb[0].mxu0
        %v608 = vadd.f32 %v464, %v607
        %v609 = vpop.f32.mrb[0].mxu0
        %610 = vmatprep.mubr.f32.mxu0 0.0
        %611 = vmatmul.mubr.f32.gmra.mrb[0].mxu0 %v427
        %v612 = vpop.f32.mrb[0].mxu0
        %v613 = vadd.f32 %v464, %v612
        %v614 = vpop.f32.mrb[0].mxu0
        %615 = vmatprep.mubr.f32.mxu0 0.0
        %616 = vmatmul.mubr.f32.gmra.mrb[0].mxu0 %v428
        %v617 = vpop.f32.mrb[0].mxu0
        %v618 = vadd.f32 %v464, %v617
        %v619 = vpop.f32.mrb[0].mxu0
        %620 = vmatprep.mubr.f32.mxu0 0.0
        %621 = vmatmul.mubr.f32.gmra.mrb[0].mxu0 %v429
        %v622 = vpop.f32.mrb[0].mxu0
        %v623 = vadd.f32 %v464, %v622
        %v624 = vpop.f32.mrb[0].mxu0
        %625 = vmatprep.mubr.f32.mxu0 0.0
        %626 = vmatmul.mubr.f32.gmra.mrb[0].mxu0 %v430
        %v627 = vpop.f32.mrb[0].mxu0
        %v628 = vadd.f32 %v464, %v627
        %v629 = vpop.f32.mrb[0].mxu0
        %630 = vmatprep.mubr.f32.mxu0 0.0
        %631 = vmatmul.mubr.f32.gmra.mrb[0].mxu0 %v431
        %v632 = vpop.f32.mrb[0].mxu0
        %v633 = vadd.f32 %v464, %v632
        %v634 = vpop.f32.mrb[0].mxu0
        %635 = vmatprep.mubr.f32.mxu0 0.0
        %636 = vmatmul.mubr.f32.gmra.mrb[0].mxu0 %v432
        %v637 = vpop.f32.mrb[0].mxu0
        %v638 = vadd.f32 %v464, %v637
        %v639 = vpop.f32.mrb[0].mxu0
        %640 = vmatprep.mubr.f32.mxu0 0.0
        %641 = vmatmul.mubr.f32.gmra.mrb[0].mxu0 %v433
        %v642 = vpop.f32.mrb[0].mxu0
        %v643 = vadd.f32 %v464, %v642
        %v644 = vpop.f32.mrb[0].mxu0
        %645 = vmatprep.mubr.f32.mxu0 0.0
        %646 = vmatmul.mubr.f32.gmra.mrb[0].mxu0 %v434
        %v647 = vpop.f32.mrb[0].mxu0
        %v648 = vadd.f32 %v464, %v647
        %v649 = vpop.f32.mrb[0].mxu0
        %650 = vmatprep.mubr.f32.mxu0 0.0
        %651 = vmatmul.mubr.f32.gmra.mrb[0].mxu0 %v435
        %v652 = vpop.f32.mrb[0].mxu0
        %v653 = vadd.f32 %v464, %v652
        %v654 = vpop.f32.mrb[0].mxu0
        %655 = vmatprep.mubr.f32.mxu0 0.0
        %656 = vmatmul.mubr.f32.gmra.mrb[0].mxu0 %v436
        %v657 = vpop.f32.mrb[0].mxu0
        %v658 = vadd.f32 %v464, %v657
        %v659 = vpop.f32.mrb[0].mxu0
        %660 = vmatprep.mubr.f32.mxu0 0.0
        %661 = vmatmul.mubr.f32.gmra.mrb[0].mxu0 %v437
        %v662 = vpop.f32.mrb[0].mxu0
        %v663 = vadd.f32 %v464, %v662
        %v664 = vpop.f32.mrb[0].mxu0
        %665 = vmatprep.mubr.f32.mxu0 0.0
        %666 = vmatmul.mubr.f32.gmra.mrb[0].mxu0 %v438
        %v667 = vpop.f32.mrb[0].mxu0
        %v668 = vadd.f32 %v464, %v667
        %v669 = vpop.f32.mrb[0].mxu0
        %670 = vmatprep.mubr.f32.mxu0 0.0
        %671 = vmatmul.mubr.f32.gmra.mrb[0].mxu0 %v439
        %v672 = vpop.f32.mrb[0].mxu0
        %v673 = vadd.f32 %v464, %v672
        %v674 = vpop.f32.mrb[0].mxu0
        %675 = vmatprep.mubr.f32.mxu0 0.0
        %676 = vmatmul.mubr.f32.gmra.mrb[0].mxu0 %v440
        %v677 = vpop.f32.mrb[0].mxu0
        %v678 = vadd.f32 %v464, %v677
        %v679 = vpop.f32.mrb[0].mxu0
        %680 = vmatprep.mubr.f32.mxu0 0.0
        %681 = vmatmul.mubr.f32.gmra.mrb[0].mxu0 %v441
        %v682 = vpop.f32.mrb[0].mxu0
        %v683 = vadd.f32 %v464, %v682
        %v684 = vpop.f32.mrb[0].mxu0
        %685 = vmatprep.mubr.f32.mxu0 0.0
        %686 = vmatmul.mubr.f32.gmra.mrb[0].mxu0 %v442
        %v687 = vpop.f32.mrb[0].mxu0
        %v688 = vadd.f32 %v464, %v687
        %v689 = vpop.f32.mrb[0].mxu0
        %690 = vdwg.mxu0
        %v691 = vmax.f32 %v533, 0.0
        %v692 = vmax.f32 %v538, 0.0
        %v693 = vmax.f32 %v543, 0.0
        %v694 = vmax.f32 %v548, 0.0
        %v695 = vmax.f32 %v553, 0.0
        %v696 = vmax.f32 %v558, 0.0
        %v697 = vmax.f32 %v563, 0.0
        %v698 = vmax.f32 %v568, 0.0
        %v699 = vmax.f32 %v573, 0.0
        %v700 = vmax.f32 %v578, 0.0
        %v701 = vmax.f32 %v583, 0.0
        %v702 = vmax.f32 %v588, 0.0
        %v703 = vmax.f32 %v593, 0.0
        %v704 = vmax.f32 %v598, 0.0
        %v705 = vmax.f32 %v603, 0.0
        %v706 = vmax.f32 %v608, 0.0
        %v707 = vmax.f32 %v613, 0.0
        %v708 = vmax.f32 %v618, 0.0
        %v709 = vmax.f32 %v623, 0.0
        %v710 = vmax.f32 %v628, 0.0
        %v711 = vmax.f32 %v633, 0.0
        %v712 = vmax.f32 %v638, 0.0
        %v713 = vmax.f32 %v643, 0.0
        %v714 = vmax.f32 %v648, 0.0
        %v715 = vmax.f32 %v653, 0.0
        %v716 = vmax.f32 %v658, 0.0
        %v717 = vmax.f32 %v663, 0.0
        %v718 = vmax.f32 %v668, 0.0
        %v719 = vmax.f32 %v673, 0.0
        %v720 = vmax.f32 %v678, 0.0
        %v721 = vmax.f32 %v683, 0.0
        %v722 = vmax.f32 %v688, 0.0
        %v723 = vld [vmem:[#allocation7] sm:$0xff]
        %v724 = vld [vmem:[#allocation7 + $0x8] sm:$0xff]
        %v725 = vld [vmem:[#allocation7 + $0x10] sm:$0xff]
        %v726 = vld [vmem:[#allocation7 + $0x18] sm:$0xff]
        %v727 = vld [vmem:[#allocation7 + $0x20] sm:$0xff]
        %v728 = vld [vmem:[#allocation7 + $0x28] sm:$0xff]
        %v729 = vld [vmem:[#allocation7 + $0x30] sm:$0xff]
        %v730 = vld [vmem:[#allocation7 + $0x38] sm:$0xff]
        %v731 = vld [vmem:[#allocation7 + $0x40] sm:$0xff]
        %v732 = vld [vmem:[#allocation7 + $0x48] sm:$0xff]
        %v733 = vld [vmem:[#allocation7 + $0x50] sm:$0xff]
        %v734 = vld [vmem:[#allocation7 + $0x58] sm:$0xff]
        %v735 = vld [vmem:[#allocation7 + $0x60] sm:$0xff]
        %v736 = vld [vmem:[#allocation7 + $0x68] sm:$0xff]
        %v737 = vld [vmem:[#allocation7 + $0x70] sm:$0xff]
        %v738 = vld [vmem:[#allocation7 + $0x78] sm:$0xff]
        %v739 = vld [vmem:[#allocation7 + $0x80] sm:$0xff]
        %v740 = vld [vmem:[#allocation7 + $0x88] sm:$0xff]
        %v741 = vld [vmem:[#allocation7 + $0x90] sm:$0xff]
        %v742 = vld [vmem:[#allocation7 + $0x98] sm:$0xff]
        %v743 = vld [vmem:[#allocation7 + $0xa0] sm:$0xff]
        %v744 = vld [vmem:[#allocation7 + $0xa8] sm:$0xff]
        %v745 = vld [vmem:[#allocation7 + $0xb0] sm:$0xff]
        %v746 = vld [vmem:[#allocation7 + $0xb8] sm:$0xff]
        %v747 = vld [vmem:[#allocation7 + $0xc0] sm:$0xff]
        %v748 = vld [vmem:[#allocation7 + $0xc8] sm:$0xff]
        %v749 = vld [vmem:[#allocation7 + $0xd0] sm:$0xff]
        %v750 = vld [vmem:[#allocation7 + $0xd8] sm:$0xff]
        %v751 = vld [vmem:[#allocation7 + $0xe0] sm:$0xff]
        %v752 = vld [vmem:[#allocation7 + $0xe8] sm:$0xff]
        %v753 = vld [vmem:[#allocation7 + $0xf0] sm:$0xff]
        %v754 = vld [vmem:[#allocation7 + $0xf8] sm:$0xff]
        %v755 = vld [vmem:[%s4] sm:$0x3]
        %v757 = vlaneseq
        %v758 = vshrl.u32 %v757, 7
        %v759 = vsub.s32 0, %v758
        %v760 = vrot.slane %v755, %v759
        %v761 = vlaneseq
        %v762 = vshrl.u32 %v761, 7
        %v763 = vsub.s32 1, %v762
        %v764 = vrot.slane %v755, %v763
        %767 = vmatprep.subr.mxu0 %v724
        %768 = vmatpush1.msra.mxu0 %v723
        %769 = vmatprep.subr.mxu0 %v726
        %770 = vmatpush1.msra.mxu0 %v725
        %771 = vmatprep.subr.mxu0 %v728
        %772 = vmatpush1.msra.mxu0 %v727
        %773 = vmatprep.subr.mxu0 %v730
        %774 = vmatpush1.msra.mxu0 %v729
        %775 = vmatprep.subr.mxu0 %v732
        %776 = vmatpush1.msra.mxu0 %v731
        %777 = vmatprep.subr.mxu0 %v734
        %778 = vmatpush1.msra.mxu0 %v733
        %779 = vmatprep.subr.mxu0 %v736
        %780 = vmatpush1.msra.mxu0 %v735
        %781 = vmatprep.subr.mxu0 %v738
        %782 = vmatpush1.msra.mxu0 %v737
        %783 = vmatprep.subr.mxu0 %v740
        %784 = vmatpush1.msra.mxu0 %v739
        %785 = vmatprep.subr.mxu0 %v742
        %786 = vmatpush1.msra.mxu0 %v741
        %787 = vmatprep.subr.mxu0 %v744
        %788 = vmatpush1.msra.mxu0 %v743
        %789 = vmatprep.subr.mxu0 %v746
        %790 = vmatpush1.msra.mxu0 %v745
        %791 = vmatprep.subr.mxu0 %v748
        %792 = vmatpush1.msra.mxu0 %v747
        %793 = vmatprep.subr.mxu0 %v750
        %794 = vmatpush1.msra.mxu0 %v749
        %795 = vmatprep.subr.mxu0 %v752
        %796 = vmatpush1.msra.mxu0 %v751
        %797 = vmatprep.subr.mxu0 %v754
        %798 = vmatpush1.msra.mxu0 %v753
        %799 = vmatprep.subr.mxu0 0.0
        %800 = vmatpush1.msra.mxu0 0.0
        %801 = vmatprep.subr.mxu0 0.0
        %802 = vmatpush1.msra.mxu0 0.0
        %803 = vmatprep.subr.mxu0 0.0
        %804 = vmatpush1.msra.mxu0 0.0
        %805 = vmatprep.subr.mxu0 0.0
        %806 = vmatpush1.msra.mxu0 0.0
        %807 = vmatprep.subr.mxu0 0.0
        %808 = vmatpush1.msra.mxu0 0.0
        %809 = vmatprep.subr.mxu0 0.0
        %810 = vmatpush1.msra.mxu0 0.0
        %811 = vmatprep.subr.mxu0 0.0
        %812 = vmatpush1.msra.mxu0 0.0
        %813 = vmatprep.subr.mxu0 0.0
        %814 = vmatpush1.msra.mxu0 0.0
        %815 = vmatprep.subr.mxu0 0.0
        %816 = vmatpush1.msra.mxu0 0.0
        %817 = vmatprep.subr.mxu0 0.0
        %818 = vmatpush1.msra.mxu0 0.0
        %819 = vmatprep.subr.mxu0 0.0
        %820 = vmatpush1.msra.mxu0 0.0
        %821 = vmatprep.subr.mxu0 0.0
        %822 = vmatpush1.msra.mxu0 0.0
        %823 = vmatprep.subr.mxu0 0.0
        %824 = vmatpush1.msra.mxu0 0.0
        %825 = vmatprep.subr.mxu0 0.0
        %826 = vmatpush1.msra.mxu0 0.0
        %827 = vmatprep.subr.mxu0 0.0
        %828 = vmatpush1.msra.mxu0 0.0
        %829 = vmatprep.subr.mxu0 0.0
        %830 = vmatpush1.msra.mxu0 0.0
        %831 = vmatprep.mubr.f32.mxu0 0.0
        %832 = vmatmul.mubr.f32.gmra.mrb[0].mxu0 %v691
        %v833 = vpop.f32.mrb[0].mxu0
        %v834 = vadd.f32 %v760, %v833
        %v835 = vpop.f32.mrb[0].mxu0
        %v836 = vadd.f32 %v764, %v835
        %837 = vmatprep.mubr.f32.mxu0 0.0
        %838 = vmatmul.mubr.f32.gmra.mrb[0].mxu0 %v692
        %v839 = vpop.f32.mrb[0].mxu0
        %v840 = vadd.f32 %v760, %v839
        %v841 = vpop.f32.mrb[0].mxu0
        %v842 = vadd.f32 %v764, %v841
        %843 = vmatprep.mubr.f32.mxu0 0.0
        %844 = vmatmul.mubr.f32.gmra.mrb[0].mxu0 %v693
        %v845 = vpop.f32.mrb[0].mxu0
        %v846 = vadd.f32 %v760, %v845
        %v847 = vpop.f32.mrb[0].mxu0
        %v848 = vadd.f32 %v764, %v847
        %849 = vmatprep.mubr.f32.mxu0 0.0
        %850 = vmatmul.mubr.f32.gmra.mrb[0].mxu0 %v694
        %v851 = vpop.f32.mrb[0].mxu0
        %v852 = vadd.f32 %v760, %v851
        %v853 = vpop.f32.mrb[0].mxu0
        %v854 = vadd.f32 %v764, %v853
        %855 = vmatprep.mubr.f32.mxu0 0.0
        %856 = vmatmul.mubr.f32.gmra.mrb[0].mxu0 %v695
        %v857 = vpop.f32.mrb[0].mxu0
        %v858 = vadd.f32 %v760, %v857
        %v859 = vpop.f32.mrb[0].mxu0
        %v860 = vadd.f32 %v764, %v859
        %861 = vmatprep.mubr.f32.mxu0 0.0
        %862 = vmatmul.mubr.f32.gmra.mrb[0].mxu0 %v696
        %v863 = vpop.f32.mrb[0].mxu0
        %v864 = vadd.f32 %v760, %v863
        %v865 = vpop.f32.mrb[0].mxu0
        %v866 = vadd.f32 %v764, %v865
        %867 = vmatprep.mubr.f32.mxu0 0.0
        %868 = vmatmul.mubr.f32.gmra.mrb[0].mxu0 %v697
        %v869 = vpop.f32.mrb[0].mxu0
        %v870 = vadd.f32 %v760, %v869
        %v871 = vpop.f32.mrb[0].mxu0
        %v872 = vadd.f32 %v764, %v871
        %873 = vmatprep.mubr.f32.mxu0 0.0
        %874 = vmatmul.mubr.f32.gmra.mrb[0].mxu0 %v698
        %v875 = vpop.f32.mrb[0].mxu0
        %v876 = vadd.f32 %v760, %v875
        %v877 = vpop.f32.mrb[0].mxu0
        %v878 = vadd.f32 %v764, %v877
        %879 = vmatprep.mubr.f32.mxu0 0.0
        %880 = vmatmul.mubr.f32.gmra.mrb[0].mxu0 %v699
        %v881 = vpop.f32.mrb[0].mxu0
        %v882 = vadd.f32 %v760, %v881
        %v883 = vpop.f32.mrb[0].mxu0
        %v884 = vadd.f32 %v764, %v883
        %885 = vmatprep.mubr.f32.mxu0 0.0
        %886 = vmatmul.mubr.f32.gmra.mrb[0].mxu0 %v700
        %v887 = vpop.f32.mrb[0].mxu0
        %v888 = vadd.f32 %v760, %v887
        %v889 = vpop.f32.mrb[0].mxu0
        %v890 = vadd.f32 %v764, %v889
        %891 = vmatprep.mubr.f32.mxu0 0.0
        %892 = vmatmul.mubr.f32.gmra.mrb[0].mxu0 %v701
        %v893 = vpop.f32.mrb[0].mxu0
        %v894 = vadd.f32 %v760, %v893
        %v895 = vpop.f32.mrb[0].mxu0
        %v896 = vadd.f32 %v764, %v895
        %897 = vmatprep.mubr.f32.mxu0 0.0
        %898 = vmatmul.mubr.f32.gmra.mrb[0].mxu0 %v702
        %v899 = vpop.f32.mrb[0].mxu0
        %v900 = vadd.f32 %v760, %v899
        %v901 = vpop.f32.mrb[0].mxu0
        %v902 = vadd.f32 %v764, %v901
        %903 = vmatprep.mubr.f32.mxu0 0.0
        %904 = vmatmul.mubr.f32.gmra.mrb[0].mxu0 %v703
        %v905 = vpop.f32.mrb[0].mxu0
        %v906 = vadd.f32 %v760, %v905
        %v907 = vpop.f32.mrb[0].mxu0
        %v908 = vadd.f32 %v764, %v907
        %909 = vmatprep.mubr.f32.mxu0 0.0
        %910 = vmatmul.mubr.f32.gmra.mrb[0].mxu0 %v704
        %v911 = vpop.f32.mrb[0].mxu0
        %v912 = vadd.f32 %v760, %v911
        %v913 = vpop.f32.mrb[0].mxu0
        %v914 = vadd.f32 %v764, %v913
        %915 = vmatprep.mubr.f32.mxu0 0.0
        %916 = vmatmul.mubr.f32.gmra.mrb[0].mxu0 %v705
        %v917 = vpop.f32.mrb[0].mxu0
        %v918 = vadd.f32 %v760, %v917
        %v919 = vpop.f32.mrb[0].mxu0
        %v920 = vadd.f32 %v764, %v919
        %921 = vmatprep.mubr.f32.mxu0 0.0
        %922 = vmatmul.mubr.f32.gmra.mrb[0].mxu0 %v706
        %v923 = vpop.f32.mrb[0].mxu0
        %v924 = vadd.f32 %v760, %v923
        %v925 = vpop.f32.mrb[0].mxu0
        %v926 = vadd.f32 %v764, %v925
        %927 = vmatprep.mubr.f32.mxu0 0.0
        %928 = vmatmul.mubr.f32.gmra.mrb[0].mxu0 %v707
        %v929 = vpop.f32.mrb[0].mxu0
        %v930 = vadd.f32 %v760, %v929
        %v931 = vpop.f32.mrb[0].mxu0
        %v932 = vadd.f32 %v764, %v931
        %933 = vmatprep.mubr.f32.mxu0 0.0
        %934 = vmatmul.mubr.f32.gmra.mrb[0].mxu0 %v708
        %v935 = vpop.f32.mrb[0].mxu0
        %v936 = vadd.f32 %v760, %v935
        %v937 = vpop.f32.mrb[0].mxu0
        %v938 = vadd.f32 %v764, %v937
        %939 = vmatprep.mubr.f32.mxu0 0.0
        %940 = vmatmul.mubr.f32.gmra.mrb[0].mxu0 %v709
        %v941 = vpop.f32.mrb[0].mxu0
        %v942 = vadd.f32 %v760, %v941
        %v943 = vpop.f32.mrb[0].mxu0
        %v944 = vadd.f32 %v764, %v943
        %945 = vmatprep.mubr.f32.mxu0 0.0
        %946 = vmatmul.mubr.f32.gmra.mrb[0].mxu0 %v710
        %v947 = vpop.f32.mrb[0].mxu0
        %v948 = vadd.f32 %v760, %v947
        %v949 = vpop.f32.mrb[0].mxu0
        %v950 = vadd.f32 %v764, %v949
        %951 = vmatprep.mubr.f32.mxu0 0.0
        %952 = vmatmul.mubr.f32.gmra.mrb[0].mxu0 %v711
        %v953 = vpop.f32.mrb[0].mxu0
        %v954 = vadd.f32 %v760, %v953
        %v955 = vpop.f32.mrb[0].mxu0
        %v956 = vadd.f32 %v764, %v955
        %957 = vmatprep.mubr.f32.mxu0 0.0
        %958 = vmatmul.mubr.f32.gmra.mrb[0].mxu0 %v712
        %v959 = vpop.f32.mrb[0].mxu0
        %v960 = vadd.f32 %v760, %v959
        %v961 = vpop.f32.mrb[0].mxu0
        %v962 = vadd.f32 %v764, %v961
        %963 = vmatprep.mubr.f32.mxu0 0.0
        %964 = vmatmul.mubr.f32.gmra.mrb[0].mxu0 %v713
        %v965 = vpop.f32.mrb[0].mxu0
        %v966 = vadd.f32 %v760, %v965
        %v967 = vpop.f32.mrb[0].mxu0
        %v968 = vadd.f32 %v764, %v967
        %969 = vmatprep.mubr.f32.mxu0 0.0
        %970 = vmatmul.mubr.f32.gmra.mrb[0].mxu0 %v714
        %v971 = vpop.f32.mrb[0].mxu0
        %v972 = vadd.f32 %v760, %v971
        %v973 = vpop.f32.mrb[0].mxu0
        %v974 = vadd.f32 %v764, %v973
        %975 = vmatprep.mubr.f32.mxu0 0.0
        %976 = vmatmul.mubr.f32.gmra.mrb[0].mxu0 %v715
        %v977 = vpop.f32.mrb[0].mxu0
        %v978 = vadd.f32 %v760, %v977
        %v979 = vpop.f32.mrb[0].mxu0
        %v980 = vadd.f32 %v764, %v979
        %981 = vmatprep.mubr.f32.mxu0 0.0
        %982 = vmatmul.mubr.f32.gmra.mrb[0].mxu0 %v716
        %v983 = vpop.f32.mrb[0].mxu0
        %v984 = vadd.f32 %v760, %v983
        %v985 = vpop.f32.mrb[0].mxu0
        %v986 = vadd.f32 %v764, %v985
        %987 = vmatprep.mubr.f32.mxu0 0.0
        %988 = vmatmul.mubr.f32.gmra.mrb[0].mxu0 %v717
        %v989 = vpop.f32.mrb[0].mxu0
        %v990 = vadd.f32 %v760, %v989
        %v991 = vpop.f32.mrb[0].mxu0
        %v992 = vadd.f32 %v764, %v991
        %993 = vmatprep.mubr.f32.mxu0 0.0
        %994 = vmatmul.mubr.f32.gmra.mrb[0].mxu0 %v718
        %v995 = vpop.f32.mrb[0].mxu0
        %v996 = vadd.f32 %v760, %v995
        %v997 = vpop.f32.mrb[0].mxu0
        %v998 = vadd.f32 %v764, %v997
        %999 = vmatprep.mubr.f32.mxu0 0.0
        %1000 = vmatmul.mubr.f32.gmra.mrb[0].mxu0 %v719
        %v1001 = vpop.f32.mrb[0].mxu0
        %v1002 = vadd.f32 %v760, %v1001
        %v1003 = vpop.f32.mrb[0].mxu0
        %v1004 = vadd.f32 %v764, %v1003
        %1005 = vmatprep.mubr.f32.mxu0 0.0
        %1006 = vmatmul.mubr.f32.gmra.mrb[0].mxu0 %v720
        %v1007 = vpop.f32.mrb[0].mxu0
        %v1008 = vadd.f32 %v760, %v1007
        %v1009 = vpop.f32.mrb[0].mxu0
        %v1010 = vadd.f32 %v764, %v1009
        %1011 = vmatprep.mubr.f32.mxu0 0.0
        %1012 = vmatmul.mubr.f32.gmra.mrb[0].mxu0 %v721
        %v1013 = vpop.f32.mrb[0].mxu0
        %v1014 = vadd.f32 %v760, %v1013
        %v1015 = vpop.f32.mrb[0].mxu0
        %v1016 = vadd.f32 %v764, %v1015
        %1017 = vmatprep.mubr.f32.mxu0 0.0
        %1018 = vmatmul.mubr.f32.gmra.mrb[0].mxu0 %v722
        %v1019 = vpop.f32.mrb[0].mxu0
        %v1020 = vadd.f32 %v760, %v1019
        %v1021 = vpop.f32.mrb[0].mxu0
        %v1022 = vadd.f32 %v764, %v1021
        %1023 = vdwg.mxu0
        %v1024 = vmax.f32 %v834, 0.0
        %v1025 = vmax.f32 %v836, 0.0
        %v1026 = vmax.f32 %v840, 0.0
        %v1027 = vmax.f32 %v842, 0.0
        %v1028 = vmax.f32 %v846, 0.0
        %v1029 = vmax.f32 %v848, 0.0
        %v1030 = vmax.f32 %v852, 0.0
        %v1031 = vmax.f32 %v854, 0.0
        %v1032 = vmax.f32 %v858, 0.0
        %v1033 = vmax.f32 %v860, 0.0
        %v1034 = vmax.f32 %v864, 0.0
        %v1035 = vmax.f32 %v866, 0.0
        %v1036 = vmax.f32 %v870, 0.0
        %v1037 = vmax.f32 %v872, 0.0
        %v1038 = vmax.f32 %v876, 0.0
        %v1039 = vmax.f32 %v878, 0.0
        %v1040 = vmax.f32 %v882, 0.0
        %v1041 = vmax.f32 %v884, 0.0
        %v1042 = vmax.f32 %v888, 0.0
        %v1043 = vmax.f32 %v890, 0.0
        %v1044 = vmax.f32 %v894, 0.0
        %v1045 = vmax.f32 %v896, 0.0
        %v1046 = vmax.f32 %v900, 0.0
        %v1047 = vmax.f32 %v902, 0.0
        %v1048 = vmax.f32 %v906, 0.0
        %v1049 = vmax.f32 %v908, 0.0
        %v1050 = vmax.f32 %v912, 0.0
        %v1051 = vmax.f32 %v914, 0.0
        %v1052 = vmax.f32 %v918, 0.0
        %v1053 = vmax.f32 %v920, 0.0
        %v1054 = vmax.f32 %v924, 0.0
        %v1055 = vmax.f32 %v926, 0.0
        %v1056 = vmax.f32 %v930, 0.0
        %v1057 = vmax.f32 %v932, 0.0
        %v1058 = vmax.f32 %v936, 0.0
        %v1059 = vmax.f32 %v938, 0.0
        %v1060 = vmax.f32 %v942, 0.0
        %v1061 = vmax.f32 %v944, 0.0
        %v1062 = vmax.f32 %v948, 0.0
        %v1063 = vmax.f32 %v950, 0.0
        %v1064 = vmax.f32 %v954, 0.0
        %v1065 = vmax.f32 %v956, 0.0
        %v1066 = vmax.f32 %v960, 0.0
        %v1067 = vmax.f32 %v962, 0.0
        %v1068 = vmax.f32 %v966, 0.0
        %v1069 = vmax.f32 %v968, 0.0
        %v1070 = vmax.f32 %v972, 0.0
        %v1071 = vmax.f32 %v974, 0.0
        %v1072 = vmax.f32 %v978, 0.0
        %v1073 = vmax.f32 %v980, 0.0
        %v1074 = vmax.f32 %v984, 0.0
        %v1075 = vmax.f32 %v986, 0.0
        %v1076 = vmax.f32 %v990, 0.0
        %v1077 = vmax.f32 %v992, 0.0
        %v1078 = vmax.f32 %v996, 0.0
        %v1079 = vmax.f32 %v998, 0.0
        %v1080 = vmax.f32 %v1002, 0.0
        %v1081 = vmax.f32 %v1004, 0.0
        %v1082 = vmax.f32 %v1008, 0.0
        %v1083 = vmax.f32 %v1010, 0.0
        %v1084 = vmax.f32 %v1014, 0.0
        %v1085 = vmax.f32 %v1016, 0.0
        %v1086 = vmax.f32 %v1020, 0.0
        %v1087 = vmax.f32 %v1022, 0.0
        %v1088 = vld [vmem:[#allocation8] sm:$0xff]
        %v1089 = vld [vmem:[#allocation8 + $0x8] sm:$0xff]
        %v1090 = vld [vmem:[#allocation8 + $0x10] sm:$0xff]
        %v1091 = vld [vmem:[#allocation8 + $0x18] sm:$0xff]
        %v1092 = vld [vmem:[#allocation8 + $0x20] sm:$0xff]
        %v1093 = vld [vmem:[#allocation8 + $0x28] sm:$0xff]
        %v1094 = vld [vmem:[#allocation8 + $0x30] sm:$0xff]
        %v1095 = vld [vmem:[#allocation8 + $0x38] sm:$0xff]
        %v1096 = vld [vmem:[#allocation8 + $0x40] sm:$0xff]
        %v1097 = vld [vmem:[#allocation8 + $0x48] sm:$0xff]
        %v1098 = vld [vmem:[#allocation8 + $0x50] sm:$0xff]
        %v1099 = vld [vmem:[#allocation8 + $0x58] sm:$0xff]
        %v1100 = vld [vmem:[#allocation8 + $0x60] sm:$0xff]
        %v1101 = vld [vmem:[#allocation8 + $0x68] sm:$0xff]
        %v1102 = vld [vmem:[#allocation8 + $0x70] sm:$0xff]
        %v1103 = vld [vmem:[#allocation8 + $0x78] sm:$0xff]
        %v1104 = vld [vmem:[#allocation8 + $0x80] sm:$0xff]
        %v1105 = vld [vmem:[#allocation8 + $0x88] sm:$0xff]
        %v1106 = vld [vmem:[#allocation8 + $0x90] sm:$0xff]
        %v1107 = vld [vmem:[#allocation8 + $0x98] sm:$0xff]
        %v1108 = vld [vmem:[#allocation8 + $0xa0] sm:$0xff]
        %v1109 = vld [vmem:[#allocation8 + $0xa8] sm:$0xff]
        %v1110 = vld [vmem:[#allocation8 + $0xb0] sm:$0xff]
        %v1111 = vld [vmem:[#allocation8 + $0xb8] sm:$0xff]
        %v1112 = vld [vmem:[#allocation8 + $0xc0] sm:$0xff]
        %v1113 = vld [vmem:[#allocation8 + $0xc8] sm:$0xff]
        %v1114 = vld [vmem:[#allocation8 + $0xd0] sm:$0xff]
        %v1115 = vld [vmem:[#allocation8 + $0xd8] sm:$0xff]
        %v1116 = vld [vmem:[#allocation8 + $0xe0] sm:$0xff]
        %v1117 = vld [vmem:[#allocation8 + $0xe8] sm:$0xff]
        %v1118 = vld [vmem:[#allocation8 + $0xf0] sm:$0xff]
        %v1119 = vld [vmem:[#allocation8 + $0xf8] sm:$0xff]
        %v1120 = vld [vmem:[%s6] sm:$0x1]
        %v1122 = vlaneseq
        %v1123 = vshrl.u32 %v1122, 7
        %v1124 = vsub.s32 0, %v1123
        %v1125 = vrot.slane %v1120, %v1124
        %1127 = vmatprep.subr.mxu0 0.0
        %1128 = vmatpush1.msra.mxu0 %v1088
        %1129 = vmatprep.subr.mxu0 0.0
        %1130 = vmatpush1.msra.mxu0 %v1089
        %1131 = vmatprep.subr.mxu0 0.0
        %1132 = vmatpush1.msra.mxu0 %v1090
        %1133 = vmatprep.subr.mxu0 0.0
        %1134 = vmatpush1.msra.mxu0 %v1091
        %1135 = vmatprep.subr.mxu0 0.0
        %1136 = vmatpush1.msra.mxu0 %v1092
        %1137 = vmatprep.subr.mxu0 0.0
        %1138 = vmatpush1.msra.mxu0 %v1093
        %1139 = vmatprep.subr.mxu0 0.0
        %1140 = vmatpush1.msra.mxu0 %v1094
        %1141 = vmatprep.subr.mxu0 0.0
        %1142 = vmatpush1.msra.mxu0 %v1095
        %1143 = vmatprep.subr.mxu0 0.0
        %1144 = vmatpush1.msra.mxu0 %v1096
        %1145 = vmatprep.subr.mxu0 0.0
        %1146 = vmatpush1.msra.mxu0 %v1097
        %1147 = vmatprep.subr.mxu0 0.0
        %1148 = vmatpush1.msra.mxu0 %v1098
        %1149 = vmatprep.subr.mxu0 0.0
        %1150 = vmatpush1.msra.mxu0 %v1099
        %1151 = vmatprep.subr.mxu0 0.0
        %1152 = vmatpush1.msra.mxu0 %v1100
        %1153 = vmatprep.subr.mxu0 0.0
        %1154 = vmatpush1.msra.mxu0 %v1101
        %1155 = vmatprep.subr.mxu0 0.0
        %1156 = vmatpush1.msra.mxu0 %v1102
        %1157 = vmatprep.subr.mxu0 0.0
        %1158 = vmatpush1.msra.mxu0 %v1103
        %1159 = vmatprep.subr.mxu0 0.0
        %1160 = vmatpush1.msra.mxu0 %v1104
        %1161 = vmatprep.subr.mxu0 0.0
        %1162 = vmatpush1.msra.mxu0 %v1105
        %1163 = vmatprep.subr.mxu0 0.0
        %1164 = vmatpush1.msra.mxu0 %v1106
        %1165 = vmatprep.subr.mxu0 0.0
        %1166 = vmatpush1.msra.mxu0 %v1107
        %1167 = vmatprep.subr.mxu0 0.0
        %1168 = vmatpush1.msra.mxu0 %v1108
        %1169 = vmatprep.subr.mxu0 0.0
        %1170 = vmatpush1.msra.mxu0 %v1109
        %1171 = vmatprep.subr.mxu0 0.0
        %1172 = vmatpush1.msra.mxu0 %v1110
        %1173 = vmatprep.subr.mxu0 0.0
        %1174 = vmatpush1.msra.mxu0 %v1111
        %1175 = vmatprep.subr.mxu0 0.0
        %1176 = vmatpush1.msra.mxu0 %v1112
        %1177 = vmatprep.subr.mxu0 0.0
        %1178 = vmatpush1.msra.mxu0 %v1113
        %1179 = vmatprep.subr.mxu0 0.0
        %1180 = vmatpush1.msra.mxu0 %v1114
        %1181 = vmatprep.subr.mxu0 0.0
        %1182 = vmatpush1.msra.mxu0 %v1115
        %1183 = vmatprep.subr.mxu0 0.0
        %1184 = vmatpush1.msra.mxu0 %v1116
        %1185 = vmatprep.subr.mxu0 0.0
        %1186 = vmatpush1.msra.mxu0 %v1117
        %1187 = vmatprep.subr.mxu0 0.0
        %1188 = vmatpush1.msra.mxu0 %v1118
        %1189 = vmatprep.subr.mxu0 0.0
        %1190 = vmatpush1.msra.mxu0 %v1119
        %1191 = vmatprep.mubr.f32.mxu0 %v1025
        %1192 = vmatmul.mubr.f32.gmra.mrb[0].mxu0 %v1024
        %v1193 = vpop.f32.mrb[0].mxu0
        %v1194 = vadd.f32 %v1125, %v1193
        %v1195 = vpop.f32.mrb[0].mxu0
        %1196 = vmatprep.mubr.f32.mxu0 %v1027
        %1197 = vmatmul.mubr.f32.gmra.mrb[0].mxu0 %v1026
        %v1198 = vpop.f32.mrb[0].mxu0
        %v1199 = vadd.f32 %v1125, %v1198
        %v1200 = vpop.f32.mrb[0].mxu0
        %1201 = vmatprep.mubr.f32.mxu0 %v1029
        %1202 = vmatmul.mubr.f32.gmra.mrb[0].mxu0 %v1028
        %v1203 = vpop.f32.mrb[0].mxu0
        %v1204 = vadd.f32 %v1125, %v1203
        %v1205 = vpop.f32.mrb[0].mxu0
        %1206 = vmatprep.mubr.f32.mxu0 %v1031
        %1207 = vmatmul.mubr.f32.gmra.mrb[0].mxu0 %v1030
        %v1208 = vpop.f32.mrb[0].mxu0
        %v1209 = vadd.f32 %v1125, %v1208
        %v1210 = vpop.f32.mrb[0].mxu0
        %1211 = vmatprep.mubr.f32.mxu0 %v1033
        %1212 = vmatmul.mubr.f32.gmra.mrb[0].mxu0 %v1032
        %v1213 = vpop.f32.mrb[0].mxu0
        %v1214 = vadd.f32 %v1125, %v1213
        %v1215 = vpop.f32.mrb[0].mxu0
        %1216 = vmatprep.mubr.f32.mxu0 %v1035
        %1217 = vmatmul.mubr.f32.gmra.mrb[0].mxu0 %v1034
        %v1218 = vpop.f32.mrb[0].mxu0
        %v1219 = vadd.f32 %v1125, %v1218
        %v1220 = vpop.f32.mrb[0].mxu0
        %1221 = vmatprep.mubr.f32.mxu0 %v1037
        %1222 = vmatmul.mubr.f32.gmra.mrb[0].mxu0 %v1036
        %v1223 = vpop.f32.mrb[0].mxu0
        %v1224 = vadd.f32 %v1125, %v1223
        %v1225 = vpop.f32.mrb[0].mxu0
        %1226 = vmatprep.mubr.f32.mxu0 %v1039
        %1227 = vmatmul.mubr.f32.gmra.mrb[0].mxu0 %v1038
        %v1228 = vpop.f32.mrb[0].mxu0
        %v1229 = vadd.f32 %v1125, %v1228
        %v1230 = vpop.f32.mrb[0].mxu0
        %1231 = vmatprep.mubr.f32.mxu0 %v1041
        %1232 = vmatmul.mubr.f32.gmra.mrb[0].mxu0 %v1040
        %v1233 = vpop.f32.mrb[0].mxu0
        %v1234 = vadd.f32 %v1125, %v1233
        %v1235 = vpop.f32.mrb[0].mxu0
        %1236 = vmatprep.mubr.f32.mxu0 %v1043
        %1237 = vmatmul.mubr.f32.gmra.mrb[0].mxu0 %v1042
        %v1238 = vpop.f32.mrb[0].mxu0
        %v1239 = vadd.f32 %v1125, %v1238
        %v1240 = vpop.f32.mrb[0].mxu0
        %1241 = vmatprep.mubr.f32.mxu0 %v1045
        %1242 = vmatmul.mubr.f32.gmra.mrb[0].mxu0 %v1044
        %v1243 = vpop.f32.mrb[0].mxu0
        %v1244 = vadd.f32 %v1125, %v1243
        %v1245 = vpop.f32.mrb[0].mxu0
        %1246 = vmatprep.mubr.f32.mxu0 %v1047
        %1247 = vmatmul.mubr.f32.gmra.mrb[0].mxu0 %v1046
        %v1248 = vpop.f32.mrb[0].mxu0
        %v1249 = vadd.f32 %v1125, %v1248
        %v1250 = vpop.f32.mrb[0].mxu0
        %1251 = vmatprep.mubr.f32.mxu0 %v1049
        %1252 = vmatmul.mubr.f32.gmra.mrb[0].mxu0 %v1048
        %v1253 = vpop.f32.mrb[0].mxu0
        %v1254 = vadd.f32 %v1125, %v1253
        %v1255 = vpop.f32.mrb[0].mxu0
        %1256 = vmatprep.mubr.f32.mxu0 %v1051
        %1257 = vmatmul.mubr.f32.gmra.mrb[0].mxu0 %v1050
        %v1258 = vpop.f32.mrb[0].mxu0
        %v1259 = vadd.f32 %v1125, %v1258
        %v1260 = vpop.f32.mrb[0].mxu0
        %1261 = vmatprep.mubr.f32.mxu0 %v1053
        %1262 = vmatmul.mubr.f32.gmra.mrb[0].mxu0 %v1052
        %v1263 = vpop.f32.mrb[0].mxu0
        %v1264 = vadd.f32 %v1125, %v1263
        %v1265 = vpop.f32.mrb[0].mxu0
        %1266 = vmatprep.mubr.f32.mxu0 %v1055
        %1267 = vmatmul.mubr.f32.gmra.mrb[0].mxu0 %v1054
        %v1268 = vpop.f32.mrb[0].mxu0
        %v1269 = vadd.f32 %v1125, %v1268
        %v1270 = vpop.f32.mrb[0].mxu0
        %1271 = vmatprep.mubr.f32.mxu0 %v1057
        %1272 = vmatmul.mubr.f32.gmra.mrb[0].mxu0 %v1056
        %v1273 = vpop.f32.mrb[0].mxu0
        %v1274 = vadd.f32 %v1125, %v1273
        %v1275 = vpop.f32.mrb[0].mxu0
        %1276 = vmatprep.mubr.f32.mxu0 %v1059
        %1277 = vmatmul.mubr.f32.gmra.mrb[0].mxu0 %v1058
        %v1278 = vpop.f32.mrb[0].mxu0
        %v1279 = vadd.f32 %v1125, %v1278
        %v1280 = vpop.f32.mrb[0].mxu0
        %1281 = vmatprep.mubr.f32.mxu0 %v1061
        %1282 = vmatmul.mubr.f32.gmra.mrb[0].mxu0 %v1060
        %v1283 = vpop.f32.mrb[0].mxu0
        %v1284 = vadd.f32 %v1125, %v1283
        %v1285 = vpop.f32.mrb[0].mxu0
        %1286 = vmatprep.mubr.f32.mxu0 %v1063
        %1287 = vmatmul.mubr.f32.gmra.mrb[0].mxu0 %v1062
        %v1288 = vpop.f32.mrb[0].mxu0
        %v1289 = vadd.f32 %v1125, %v1288
        %v1290 = vpop.f32.mrb[0].mxu0
        %1291 = vmatprep.mubr.f32.mxu0 %v1065
        %1292 = vmatmul.mubr.f32.gmra.mrb[0].mxu0 %v1064
        %v1293 = vpop.f32.mrb[0].mxu0
        %v1294 = vadd.f32 %v1125, %v1293
        %v1295 = vpop.f32.mrb[0].mxu0
        %1296 = vmatprep.mubr.f32.mxu0 %v1067
        %1297 = vmatmul.mubr.f32.gmra.mrb[0].mxu0 %v1066
        %v1298 = vpop.f32.mrb[0].mxu0
        %v1299 = vadd.f32 %v1125, %v1298
        %v1300 = vpop.f32.mrb[0].mxu0
        %1301 = vmatprep.mubr.f32.mxu0 %v1069
        %1302 = vmatmul.mubr.f32.gmra.mrb[0].mxu0 %v1068
        %v1303 = vpop.f32.mrb[0].mxu0
        %v1304 = vadd.f32 %v1125, %v1303
        %v1305 = vpop.f32.mrb[0].mxu0
        %1306 = vmatprep.mubr.f32.mxu0 %v1071
        %1307 = vmatmul.mubr.f32.gmra.mrb[0].mxu0 %v1070
        %v1308 = vpop.f32.mrb[0].mxu0
        %v1309 = vadd.f32 %v1125, %v1308
        %v1310 = vpop.f32.mrb[0].mxu0
        %1311 = vmatprep.mubr.f32.mxu0 %v1073
        %1312 = vmatmul.mubr.f32.gmra.mrb[0].mxu0 %v1072
        %v1313 = vpop.f32.mrb[0].mxu0
        %v1314 = vadd.f32 %v1125, %v1313
        %v1315 = vpop.f32.mrb[0].mxu0
        %1316 = vmatprep.mubr.f32.mxu0 %v1075
        %1317 = vmatmul.mubr.f32.gmra.mrb[0].mxu0 %v1074
        %v1318 = vpop.f32.mrb[0].mxu0
        %v1319 = vadd.f32 %v1125, %v1318
        %v1320 = vpop.f32.mrb[0].mxu0
        %1321 = vmatprep.mubr.f32.mxu0 %v1077
        %1322 = vmatmul.mubr.f32.gmra.mrb[0].mxu0 %v1076
        %v1323 = vpop.f32.mrb[0].mxu0
        %v1324 = vadd.f32 %v1125, %v1323
        %v1325 = vpop.f32.mrb[0].mxu0
        %1326 = vmatprep.mubr.f32.mxu0 %v1079
        %1327 = vmatmul.mubr.f32.gmra.mrb[0].mxu0 %v1078
        %v1328 = vpop.f32.mrb[0].mxu0
        %v1329 = vadd.f32 %v1125, %v1328
        %v1330 = vpop.f32.mrb[0].mxu0
        %1331 = vmatprep.mubr.f32.mxu0 %v1081
        %1332 = vmatmul.mubr.f32.gmra.mrb[0].mxu0 %v1080
        %v1333 = vpop.f32.mrb[0].mxu0
        %v1334 = vadd.f32 %v1125, %v1333
        %v1335 = vpop.f32.mrb[0].mxu0
        %1336 = vmatprep.mubr.f32.mxu0 %v1083
        %1337 = vmatmul.mubr.f32.gmra.mrb[0].mxu0 %v1082
        %v1338 = vpop.f32.mrb[0].mxu0
        %v1339 = vadd.f32 %v1125, %v1338
        %v1340 = vpop.f32.mrb[0].mxu0
        %1341 = vmatprep.mubr.f32.mxu0 %v1085
        %1342 = vmatmul.mubr.f32.gmra.mrb[0].mxu0 %v1084
        %v1343 = vpop.f32.mrb[0].mxu0
        %v1344 = vadd.f32 %v1125, %v1343
        %v1345 = vpop.f32.mrb[0].mxu0
        %1346 = vmatprep.mubr.f32.mxu0 %v1087
        %1347 = vmatmul.mubr.f32.gmra.mrb[0].mxu0 %v1086
        %v1348 = vpop.f32.mrb[0].mxu0
        %v1349 = vadd.f32 %v1125, %v1348
        %v1350 = vpop.f32.mrb[0].mxu0
        %1351 = vdwg.mxu0
        %v1352 = vmax.f32 %v1194, 0.0
        %v1353 = vmax.f32 %v1199, 0.0
        %v1354 = vmax.f32 %v1204, 0.0
        %v1355 = vmax.f32 %v1209, 0.0
        %v1356 = vmax.f32 %v1214, 0.0
        %v1357 = vmax.f32 %v1219, 0.0
        %v1358 = vmax.f32 %v1224, 0.0
        %v1359 = vmax.f32 %v1229, 0.0
        %v1360 = vmax.f32 %v1234, 0.0
        %v1361 = vmax.f32 %v1239, 0.0
        %v1362 = vmax.f32 %v1244, 0.0
        %v1363 = vmax.f32 %v1249, 0.0
        %v1364 = vmax.f32 %v1254, 0.0
        %v1365 = vmax.f32 %v1259, 0.0
        %v1366 = vmax.f32 %v1264, 0.0
        %v1367 = vmax.f32 %v1269, 0.0
        %v1368 = vmax.f32 %v1274, 0.0
        %v1369 = vmax.f32 %v1279, 0.0
        %v1370 = vmax.f32 %v1284, 0.0
        %v1371 = vmax.f32 %v1289, 0.0
        %v1372 = vmax.f32 %v1294, 0.0
        %v1373 = vmax.f32 %v1299, 0.0
        %v1374 = vmax.f32 %v1304, 0.0
        %v1375 = vmax.f32 %v1309, 0.0
        %v1376 = vmax.f32 %v1314, 0.0
        %v1377 = vmax.f32 %v1319, 0.0
        %v1378 = vmax.f32 %v1324, 0.0
        %v1379 = vmax.f32 %v1329, 0.0
        %v1380 = vmax.f32 %v1334, 0.0
        %v1381 = vmax.f32 %v1339, 0.0
        %v1382 = vmax.f32 %v1344, 0.0
        %v1383 = vmax.f32 %v1349, 0.0
        %v1384 = vld [vmem:[#allocation10] sm:$0xff]
        %v1385 = vld [vmem:[#allocation10 + $0x8] sm:$0xff]
        %v1386 = vld [vmem:[#allocation10 + $0x10] sm:$0xff]
        %v1387 = vld [vmem:[#allocation10 + $0x18] sm:$0xff]
        %v1388 = vld [vmem:[#allocation10 + $0x20] sm:$0xff]
        %v1389 = vld [vmem:[#allocation10 + $0x28] sm:$0xff]
        %v1390 = vld [vmem:[#allocation10 + $0x30] sm:$0xff]
        %v1391 = vld [vmem:[#allocation10 + $0x38] sm:$0xff]
        %v1392 = vld [vmem:[#allocation10 + $0x40] sm:$0xff]
        %v1393 = vld [vmem:[#allocation10 + $0x48] sm:$0xff]
        %v1394 = vld [vmem:[#allocation10 + $0x50] sm:$0xff]
        %v1395 = vld [vmem:[#allocation10 + $0x58] sm:$0xff]
        %v1396 = vld [vmem:[#allocation10 + $0x60] sm:$0xff]
        %v1397 = vld [vmem:[#allocation10 + $0x68] sm:$0xff]
        %v1398 = vld [vmem:[#allocation10 + $0x70] sm:$0xff]
        %v1399 = vld [vmem:[#allocation10 + $0x78] sm:$0xff]
        %v1400 = vld [vmem:[%s8] sm:$0x1]
        %v1402 = vlaneseq
        %v1403 = vshrl.u32 %v1402, 7
        %v1404 = vsub.s32 0, %v1403
        %v1405 = vrot.slane %v1400, %v1404
        %1407 = vmatprep.subr.mxu0 0.0
        %1408 = vmatpush1.msra.mxu0 %v1384
        %1409 = vmatprep.subr.mxu0 0.0
        %1410 = vmatpush1.msra.mxu0 %v1385
        %1411 = vmatprep.subr.mxu0 0.0
        %1412 = vmatpush1.msra.mxu0 %v1386
        %1413 = vmatprep.subr.mxu0 0.0
        %1414 = vmatpush1.msra.mxu0 %v1387
        %1415 = vmatprep.subr.mxu0 0.0
        %1416 = vmatpush1.msra.mxu0 %v1388
        %1417 = vmatprep.subr.mxu0 0.0
        %1418 = vmatpush1.msra.mxu0 %v1389
        %1419 = vmatprep.subr.mxu0 0.0
        %1420 = vmatpush1.msra.mxu0 %v1390
        %1421 = vmatprep.subr.mxu0 0.0
        %1422 = vmatpush1.msra.mxu0 %v1391
        %1423 = vmatprep.subr.mxu0 0.0
        %1424 = vmatpush1.msra.mxu0 %v1392
        %1425 = vmatprep.subr.mxu0 0.0
        %1426 = vmatpush1.msra.mxu0 %v1393
        %1427 = vmatprep.subr.mxu0 0.0
        %1428 = vmatpush1.msra.mxu0 %v1394
        %1429 = vmatprep.subr.mxu0 0.0
        %1430 = vmatpush1.msra.mxu0 %v1395
        %1431 = vmatprep.subr.mxu0 0.0
        %1432 = vmatpush1.msra.mxu0 %v1396
        %1433 = vmatprep.subr.mxu0 0.0
        %1434 = vmatpush1.msra.mxu0 %v1397
        %1435 = vmatprep.subr.mxu0 0.0
        %1436 = vmatpush1.msra.mxu0 %v1398
        %1437 = vmatprep.subr.mxu0 0.0
        %1438 = vmatpush1.msra.mxu0 %v1399
        %1439 = vmatprep.subr.mxu0 0.0
        %1440 = vmatpush1.msra.mxu0 0.0
        %1441 = vmatprep.subr.mxu0 0.0
        %1442 = vmatpush1.msra.mxu0 0.0
        %1443 = vmatprep.subr.mxu0 0.0
        %1444 = vmatpush1.msra.mxu0 0.0
        %1445 = vmatprep.subr.mxu0 0.0
        %1446 = vmatpush1.msra.mxu0 0.0
        %1447 = vmatprep.subr.mxu0 0.0
        %1448 = vmatpush1.msra.mxu0 0.0
        %1449 = vmatprep.subr.mxu0 0.0
        %1450 = vmatpush1.msra.mxu0 0.0
        %1451 = vmatprep.subr.mxu0 0.0
        %1452 = vmatpush1.msra.mxu0 0.0
        %1453 = vmatprep.subr.mxu0 0.0
        %1454 = vmatpush1.msra.mxu0 0.0
        %1455 = vmatprep.subr.mxu0 0.0
        %1456 = vmatpush1.msra.mxu0 0.0
        %1457 = vmatprep.subr.mxu0 0.0
        %1458 = vmatpush1.msra.mxu0 0.0
        %1459 = vmatprep.subr.mxu0 0.0
        %1460 = vmatpush1.msra.mxu0 0.0
        %1461 = vmatprep.subr.mxu0 0.0
        %1462 = vmatpush1.msra.mxu0 0.0
        %1463 = vmatprep.subr.mxu0 0.0
        %1464 = vmatpush1.msra.mxu0 0.0
        %1465 = vmatprep.subr.mxu0 0.0
        %1466 = vmatpush1.msra.mxu0 0.0
        %1467 = vmatprep.subr.mxu0 0.0
        %1468 = vmatpush1.msra.mxu0 0.0
        %1469 = vmatprep.subr.mxu0 0.0
        %1470 = vmatpush1.msra.mxu0 0.0
        %1471 = vmatprep.mubr.f32.mxu0 0.0
        %1472 = vmatmul.mubr.f32.gmra.mrb[0].mxu0 %v1352
        %v1473 = vpop.f32.mrb[0].mxu0
        %v1474 = vadd.f32 %v1405, %v1473
        %v1475 = vpop.f32.mrb[0].mxu0
        %1476 = vmatprep.mubr.f32.mxu0 0.0
        %1477 = vmatmul.mubr.f32.gmra.mrb[0].mxu0 %v1353
        %v1478 = vpop.f32.mrb[0].mxu0
        %v1479 = vadd.f32 %v1405, %v1478
        %v1480 = vpop.f32.mrb[0].mxu0
        %1481 = vmatprep.mubr.f32.mxu0 0.0
        %1482 = vmatmul.mubr.f32.gmra.mrb[0].mxu0 %v1354
        %v1483 = vpop.f32.mrb[0].mxu0
        %v1484 = vadd.f32 %v1405, %v1483
        %v1485 = vpop.f32.mrb[0].mxu0
        %1486 = vmatprep.mubr.f32.mxu0 0.0
        %1487 = vmatmul.mubr.f32.gmra.mrb[0].mxu0 %v1355
        %v1488 = vpop.f32.mrb[0].mxu0
        %v1489 = vadd.f32 %v1405, %v1488
        %v1490 = vpop.f32.mrb[0].mxu0
        %1491 = vmatprep.mubr.f32.mxu0 0.0
        %1492 = vmatmul.mubr.f32.gmra.mrb[0].mxu0 %v1356
        %v1493 = vpop.f32.mrb[0].mxu0
        %v1494 = vadd.f32 %v1405, %v1493
        %v1495 = vpop.f32.mrb[0].mxu0
        %1496 = vmatprep.mubr.f32.mxu0 0.0
        %1497 = vmatmul.mubr.f32.gmra.mrb[0].mxu0 %v1357
        %v1498 = vpop.f32.mrb[0].mxu0
        %v1499 = vadd.f32 %v1405, %v1498
        %v1500 = vpop.f32.mrb[0].mxu0
        %1501 = vmatprep.mubr.f32.mxu0 0.0
        %1502 = vmatmul.mubr.f32.gmra.mrb[0].mxu0 %v1358
        %v1503 = vpop.f32.mrb[0].mxu0
        %v1504 = vadd.f32 %v1405, %v1503
        %v1505 = vpop.f32.mrb[0].mxu0
        %1506 = vmatprep.mubr.f32.mxu0 0.0
        %1507 = vmatmul.mubr.f32.gmra.mrb[0].mxu0 %v1359
        %v1508 = vpop.f32.mrb[0].mxu0
        %v1509 = vadd.f32 %v1405, %v1508
        %v1510 = vpop.f32.mrb[0].mxu0
        %1511 = vmatprep.mubr.f32.mxu0 0.0
        %1512 = vmatmul.mubr.f32.gmra.mrb[0].mxu0 %v1360
        %v1513 = vpop.f32.mrb[0].mxu0
        %v1514 = vadd.f32 %v1405, %v1513
        %v1515 = vpop.f32.mrb[0].mxu0
        %1516 = vmatprep.mubr.f32.mxu0 0.0
        %1517 = vmatmul.mubr.f32.gmra.mrb[0].mxu0 %v1361
        %v1518 = vpop.f32.mrb[0].mxu0
        %v1519 = vadd.f32 %v1405, %v1518
        %v1520 = vpop.f32.mrb[0].mxu0
        %1521 = vmatprep.mubr.f32.mxu0 0.0
        %1522 = vmatmul.mubr.f32.gmra.mrb[0].mxu0 %v1362
        %v1523 = vpop.f32.mrb[0].mxu0
        %v1524 = vadd.f32 %v1405, %v1523
        %v1525 = vpop.f32.mrb[0].mxu0
        %1526 = vmatprep.mubr.f32.mxu0 0.0
        %1527 = vmatmul.mubr.f32.gmra.mrb[0].mxu0 %v1363
        %v1528 = vpop.f32.mrb[0].mxu0
        %v1529 = vadd.f32 %v1405, %v1528
        %v1530 = vpop.f32.mrb[0].mxu0
        %1531 = vmatprep.mubr.f32.mxu0 0.0
        %1532 = vmatmul.mubr.f32.gmra.mrb[0].mxu0 %v1364
        %v1533 = vpop.f32.mrb[0].mxu0
        %v1534 = vadd.f32 %v1405, %v1533
        %v1535 = vpop.f32.mrb[0].mxu0
        %1536 = vmatprep.mubr.f32.mxu0 0.0
        %1537 = vmatmul.mubr.f32.gmra.mrb[0].mxu0 %v1365
        %v1538 = vpop.f32.mrb[0].mxu0
        %v1539 = vadd.f32 %v1405, %v1538
        %v1540 = vpop.f32.mrb[0].mxu0
        %1541 = vmatprep.mubr.f32.mxu0 0.0
        %1542 = vmatmul.mubr.f32.gmra.mrb[0].mxu0 %v1366
        %v1543 = vpop.f32.mrb[0].mxu0
        %v1544 = vadd.f32 %v1405, %v1543
        %v1545 = vpop.f32.mrb[0].mxu0
        %1546 = vmatprep.mubr.f32.mxu0 0.0
        %1547 = vmatmul.mubr.f32.gmra.mrb[0].mxu0 %v1367
        %v1548 = vpop.f32.mrb[0].mxu0
        %v1549 = vadd.f32 %v1405, %v1548
        %v1550 = vpop.f32.mrb[0].mxu0
        %1551 = vmatprep.mubr.f32.mxu0 0.0
        %1552 = vmatmul.mubr.f32.gmra.mrb[0].mxu0 %v1368
        %v1553 = vpop.f32.mrb[0].mxu0
        %v1554 = vadd.f32 %v1405, %v1553
        %v1555 = vpop.f32.mrb[0].mxu0
        %1556 = vmatprep.mubr.f32.mxu0 0.0
        %1557 = vmatmul.mubr.f32.gmra.mrb[0].mxu0 %v1369
        %v1558 = vpop.f32.mrb[0].mxu0
        %v1559 = vadd.f32 %v1405, %v1558
        %v1560 = vpop.f32.mrb[0].mxu0
        %1561 = vmatprep.mubr.f32.mxu0 0.0
        %1562 = vmatmul.mubr.f32.gmra.mrb[0].mxu0 %v1370
        %v1563 = vpop.f32.mrb[0].mxu0
        %v1564 = vadd.f32 %v1405, %v1563
        %v1565 = vpop.f32.mrb[0].mxu0
        %1566 = vmatprep.mubr.f32.mxu0 0.0
        %1567 = vmatmul.mubr.f32.gmra.mrb[0].mxu0 %v1371
        %v1568 = vpop.f32.mrb[0].mxu0
        %v1569 = vadd.f32 %v1405, %v1568
        %v1570 = vpop.f32.mrb[0].mxu0
        %1571 = vmatprep.mubr.f32.mxu0 0.0
        %1572 = vmatmul.mubr.f32.gmra.mrb[0].mxu0 %v1372
        %v1573 = vpop.f32.mrb[0].mxu0
        %v1574 = vadd.f32 %v1405, %v1573
        %v1575 = vpop.f32.mrb[0].mxu0
        %1576 = vmatprep.mubr.f32.mxu0 0.0
        %1577 = vmatmul.mubr.f32.gmra.mrb[0].mxu0 %v1373
        %v1578 = vpop.f32.mrb[0].mxu0
        %v1579 = vadd.f32 %v1405, %v1578
        %v1580 = vpop.f32.mrb[0].mxu0
        %1581 = vmatprep.mubr.f32.mxu0 0.0
        %1582 = vmatmul.mubr.f32.gmra.mrb[0].mxu0 %v1374
        %v1583 = vpop.f32.mrb[0].mxu0
        %v1584 = vadd.f32 %v1405, %v1583
        %v1585 = vpop.f32.mrb[0].mxu0
        %1586 = vmatprep.mubr.f32.mxu0 0.0
        %1587 = vmatmul.mubr.f32.gmra.mrb[0].mxu0 %v1375
        %v1588 = vpop.f32.mrb[0].mxu0
        %v1589 = vadd.f32 %v1405, %v1588
        %v1590 = vpop.f32.mrb[0].mxu0
        %1591 = vmatprep.mubr.f32.mxu0 0.0
        %1592 = vmatmul.mubr.f32.gmra.mrb[0].mxu0 %v1376
        %v1593 = vpop.f32.mrb[0].mxu0
        %v1594 = vadd.f32 %v1405, %v1593
        %v1595 = vpop.f32.mrb[0].mxu0
        %1596 = vmatprep.mubr.f32.mxu0 0.0
        %1597 = vmatmul.mubr.f32.gmra.mrb[0].mxu0 %v1377
        %v1598 = vpop.f32.mrb[0].mxu0
        %v1599 = vadd.f32 %v1405, %v1598
        %v1600 = vpop.f32.mrb[0].mxu0
        %1601 = vmatprep.mubr.f32.mxu0 0.0
        %1602 = vmatmul.mubr.f32.gmra.mrb[0].mxu0 %v1378
        %v1603 = vpop.f32.mrb[0].mxu0
        %v1604 = vadd.f32 %v1405, %v1603
        %v1605 = vpop.f32.mrb[0].mxu0
        %1606 = vmatprep.mubr.f32.mxu0 0.0
        %1607 = vmatmul.mubr.f32.gmra.mrb[0].mxu0 %v1379
        %v1608 = vpop.f32.mrb[0].mxu0
        %v1609 = vadd.f32 %v1405, %v1608
        %v1610 = vpop.f32.mrb[0].mxu0
        %1611 = vmatprep.mubr.f32.mxu0 0.0
        %1612 = vmatmul.mubr.f32.gmra.mrb[0].mxu0 %v1380
        %v1613 = vpop.f32.mrb[0].mxu0
        %v1614 = vadd.f32 %v1405, %v1613
        %v1615 = vpop.f32.mrb[0].mxu0
        %1616 = vmatprep.mubr.f32.mxu0 0.0
        %1617 = vmatmul.mubr.f32.gmra.mrb[0].mxu0 %v1381
        %v1618 = vpop.f32.mrb[0].mxu0
        %v1619 = vadd.f32 %v1405, %v1618
        %v1620 = vpop.f32.mrb[0].mxu0
        %1621 = vmatprep.mubr.f32.mxu0 0.0
        %1622 = vmatmul.mubr.f32.gmra.mrb[0].mxu0 %v1382
        %v1623 = vpop.f32.mrb[0].mxu0
        %v1624 = vadd.f32 %v1405, %v1623
        %v1625 = vpop.f32.mrb[0].mxu0
        %1626 = vmatprep.mubr.f32.mxu0 0.0
        %1627 = vmatmul.mubr.f32.gmra.mrb[0].mxu0 %v1383
        %v1628 = vpop.f32.mrb[0].mxu0
        %v1629 = vadd.f32 %v1405, %v1628
        %v1630 = vpop.f32.mrb[0].mxu0
        %1631 = vdwg.mxu0
        %1632 = vst [vmem:[%s408] sm:$0xff] %v1474
        %1633 = vst [vmem:[%s408 + $0x8] sm:$0xff] %v1479
        %1634 = vst [vmem:[%s408 + $0x10] sm:$0xff] %v1484
        %1635 = vst [vmem:[%s408 + $0x18] sm:$0xff] %v1489
        %1636 = vst [vmem:[%s408 + $0x20] sm:$0xff] %v1494
        %1637 = vst [vmem:[%s408 + $0x28] sm:$0xff] %v1499
        %1638 = vst [vmem:[%s408 + $0x30] sm:$0xff] %v1504
        %1639 = vst [vmem:[%s408 + $0x38] sm:$0xff] %v1509
        %1640 = vst [vmem:[%s408 + $0x40] sm:$0xff] %v1514
        %1641 = vst [vmem:[%s408 + $0x48] sm:$0xff] %v1519
        %1642 = vst [vmem:[%s408 + $0x50] sm:$0xff] %v1524
        %1643 = vst [vmem:[%s408 + $0x58] sm:$0xff] %v1529
        %1644 = vst [vmem:[%s408 + $0x60] sm:$0xff] %v1534
        %1645 = vst [vmem:[%s408 + $0x68] sm:$0xff] %v1539
        %1646 = vst [vmem:[%s408 + $0x70] sm:$0xff] %v1544
        %1647 = vst [vmem:[%s408 + $0x78] sm:$0xff] %v1549
        %1648 = vst [vmem:[%s408 + $0x80] sm:$0xff] %v1554
        %1649 = vst [vmem:[%s408 + $0x88] sm:$0xff] %v1559
        %1650 = vst [vmem:[%s408 + $0x90] sm:$0xff] %v1564
        %1651 = vst [vmem:[%s408 + $0x98] sm:$0xff] %v1569
        %1652 = vst [vmem:[%s408 + $0xa0] sm:$0xff] %v1574
        %1653 = vst [vmem:[%s408 + $0xa8] sm:$0xff] %v1579
        %1654 = vst [vmem:[%s408 + $0xb0] sm:$0xff] %v1584
        %1655 = vst [vmem:[%s408 + $0xb8] sm:$0xff] %v1589
        %1656 = vst [vmem:[%s408 + $0xc0] sm:$0xff] %v1594
        %1657 = vst [vmem:[%s408 + $0xc8] sm:$0xff] %v1599
        %1658 = vst [vmem:[%s408 + $0xd0] sm:$0xff] %v1604
        %1659 = vst [vmem:[%s408 + $0xd8] sm:$0xff] %v1609
        %1660 = vst [vmem:[%s408 + $0xe0] sm:$0xff] %v1614
        %1661 = vst [vmem:[%s408 + $0xe8] sm:$0xff] %v1619
        %1662 = vst [vmem:[%s408 + $0xf0] sm:$0xff] %v1624
        %1663 = vst [vmem:[%s408 + $0xf8] sm:$0xff] %v1629
        %s1664 = sand.u32 %s230, 1
        %s1665 = scalar_lea.sflag [#allocation4], %s1664
        %s1666 = sand.u32 %s230, 1
        %s1667 = smul.addr %s1666, 256
        %s1668 = scalar_lea.vmem [#allocation11], %s1667
        // Predicated region
        $region77: #{tpu_custom_call.1} parent=55 // pred_check
          %p1669 = pneg %p240
        $region78: #{tpu_custom_call.1} parent=55 // pred_check_branch
          %1671 = sbr.rel (%p1669) target = $region80
        $region79: #{tpu_custom_call.1} parent=55 // pred_region
          %s1672 = smul.u32 32, %s28
          %s1674 = ssub.s32 4096, 4096
          %1675 = vsyncadd %s1665, %s1674
          %s1676 = smul.addr %s1672, 128
          %s1677 = scalar_lea.hbm %s9, %s1676
          %s1678 = sshll.u32 %s1668, 4
          %s1679 = int_to_ptr.vmem [resolvable:$true] %s1678
          %1684 = dma.vmem_to_hbm [thread:$0]  %s1679, 4096, %s1677, %s1665, 128, 128, 8
        $region80: #{tpu_custom_call.1} parent=55 // pred_fallthru
          _
      $region56: #{tpu_custom_call.1} parent=5 // pred_fallthru
        _
      %p1685 = scmp.le.s32.totalorder 2, %s23
      // Predicated region
      $region81: #{tpu_custom_call.1} parent=5 // pred_check
        %p1686 = pneg %p1685
      $region82: #{tpu_custom_call.1} parent=5 // pred_check_branch
        %1688 = sbr.rel (%p1686) target = $region84
      $region83: #{tpu_custom_call.1} parent=5 // pred_region
        %s1689 = ssub.s32 %s23, 2
        // Predicated region
        $region85: #{tpu_custom_call.1} parent=83 // pred_check
          %p1690 = pneg %p246
        $region86: #{tpu_custom_call.1} parent=83 // pred_check_branch
          %1692 = sbr.rel (%p1690) target = $region88
        $region87: #{tpu_custom_call.1} parent=83 // pred_region
          %s1693 = sand.u32 %s231, 1
          %s1694 = scalar_lea.sflag [#allocation4], %s1693
          %s1695 = sand.u32 %s231, 1
          %s1696 = smul.addr %s1695, 256
          %s1697 = scalar_lea.vmem [#allocation11], %s1696
          %1698 = dma.done %s1694, 4096
        $region88: #{tpu_custom_call.1} parent=83 // pred_fallthru
          _
      $region84: #{tpu_custom_call.1} parent=5 // pred_fallthru
        _
    $region6: #{tpu_custom_call.1} parent=1 // loop_footer
      %s27 = sadd.s32 1, %s23
    $region7: #{tpu_custom_call.1} parent=1 // loop_footer_branch
      %22 = sbr.rel target = $region3
    $region8: #{tpu_custom_call.1} parent=1 // loop_exit
      _
    %1699 = vsyncpa [#allocation3], 1
    %s1700 = scalar_lea.sflag [#allocation3], 1
    %1701 = vsyncpa %s1700, 1
    %1702 = vsyncpa [#allocation6], 1
    %1703 = vsyncpa [#allocation9], 1
    %1704 = vsyncpa [#allocation4], 1
    %s1705 = scalar_lea.sflag [#allocation4], 1
    %1706 = vsyncpa %s1705, 1

</llo_original>
